<compile_context>
chip_gen: v7x
topology: tpu7x:2x2x1
jax: 0.10.0
libtpu: 0.0.40
codegen_flags: <defaults>
</compile_context>

<pallas_src>
import jax
import jax.numpy as jnp
from jax.experimental import pallas as pl
from jax.experimental.pallas import tpu as pltpu

EMBED_DIM = 64
NUM_HEADS = 4
HEAD_DIM = EMBED_DIM // NUM_HEADS          # 16
VOCAB_SIZE = 1000
VOCAB_PAD = 1024                           # lane-dense vocab; sliced back to 1000 outside
FEAT_DIM = 64


def _round_up(x, m):
    return (x + m - 1) // m * m


def _mig_dpg_kernel(
    x_ref,                                  # (TB, 256)  [user | item | text | vis]
    wbig_ref, bbig_ref,                     # (256, 640) bf16, (1, 640) f32  packed QKV
    lind_ref, eind_ref, sind_ref,           # (512,32), (32,512), (512,128) bf16 indicators
    w1_ref, b1_ref,                         # (128, 192) bf16 (out_proj folded), (1,192) f32
    wrd_ref, brd_ref,                       # (128, 2) bf16 block-diag rec/dpo, (1,2) f32
    wg2_ref, bg2_ref,                       # (64, 1024) bf16, (1,1024) f32
    rd_ref, gen_ref,                        # (TB, 2) f32, (TB, 1024) f32
):
    f32 = jnp.float32
    bf16 = jnp.bfloat16
    d = EMBED_DIM

    x = x_ref[...].astype(bf16)

    # Single K=256 matmul -> lane-packed [q_u|q_i | k_u|k_i|k_t|k_v | v_u|v_i|v_t|v_v]
    qkv = jnp.dot(x, wbig_ref[...], preferred_element_type=f32) + bbig_ref[...]   # (TB, 640)
    q_u = qkv[:, 0:d]
    q_i = qkv[:, d:2 * d]
    k_p = qkv[:, 2 * d:6 * d]                    # (TB, 256)
    v_p = qkv[:, 6 * d:10 * d]                   # (TB, 256)

    # q*k products, lane-packed col = qi*256 + kj*64 + dim  -> (TB, 512)
    q_u4 = jnp.concatenate([q_u, q_u, q_u, q_u], axis=1)
    q_i4 = jnp.concatenate([q_i, q_i, q_i, q_i], axis=1)
    prods = jnp.concatenate([q_u4 * k_p, q_i4 * k_p], axis=1)

    # All 32 head logits in one block-diag indicator matmul (1/sqrt(hd) folded in).
    logits = jnp.dot(prods.astype(bf16), lind_ref[...],
                     preferred_element_type=f32)                 # (TB, 32), col = kj*8+qi*4+h

    # Softmax over the 4 keys (per query token, per head) in f32.
    l0 = logits[:, 0:8]
    l1 = logits[:, 8:16]
    l2 = logits[:, 16:24]
    l3 = logits[:, 24:32]
    m = jnp.maximum(jnp.maximum(l0, l1), jnp.maximum(l2, l3))
    e0 = jnp.exp(l0 - m)
    e1 = jnp.exp(l1 - m)
    e2 = jnp.exp(l2 - m)
    e3 = jnp.exp(l3 - m)
    inv = 1.0 / (e0 + e1 + e2 + e3)
    probs = jnp.concatenate([e0 * inv, e1 * inv, e2 * inv, e3 * inv], axis=1)   # (TB, 32)

    # Expand probs to 16-lane head groups (exact 0/1 copy through the MXU),
    # weight the lane-packed values, and key-group-sum back to (TB, 128).
    p_exp = jnp.dot(probs.astype(bf16), eind_ref[...],
                    preferred_element_type=f32)                  # (TB, 512)
    vv = jnp.concatenate([v_p, v_p], axis=1)                     # (TB, 512)
    weighted = p_exp * vv
    attn_ui = jnp.dot(weighted.astype(bf16), sind_ref[...],
                      preferred_element_type=f32)                # (TB, 128) = [attn_u | attn_i]

    # Fused first layers of rec/dpo/gen heads, with attention out_proj composed in.
    h_all = jnp.maximum(
        jnp.dot(attn_ui.astype(bf16), w1_ref[...], preferred_element_type=f32)
        + b1_ref[...], 0.0)                                      # (TB, 192)
    # TODO(synk): nn.Dropout(0.2) in recommendation_net treated as eval-mode no-op.

    # Recommendation + DPO scores, one lane-packed (TB, 2) store (block-diag weight).
    rd_ref[...] = (jnp.dot(h_all[:, :2 * d].astype(bf16), wrd_ref[...],
                           preferred_element_type=f32) + brd_ref[...])

    # Generation logits, lane-dense padded vocab.
    gen_ref[...] = (jnp.dot(h_all[:, 2 * d:3 * d].astype(bf16), wg2_ref[...],
                            preferred_element_type=f32) + bg2_ref[...])


def _linear_init(key, fan_in, fan_out):
    """PyTorch nn.Linear-style uniform init, weight stored pre-transposed (in, out)."""
    kw, kb = jax.random.split(key)
    bound = 1.0 / (fan_in ** 0.5)
    w = jax.random.uniform(kw, (fan_in, fan_out), jnp.float32, -bound, bound)
    b = jax.random.uniform(kb, (1, fan_out), jnp.float32, -bound, bound)
    return w, b


def init_params(key, num_users, num_items, d=EMBED_DIM):
    keys = jax.random.split(key, 12)
    p = {}
    p["user_embedding"] = jax.random.normal(keys[0], (num_users, d), jnp.float32)
    p["item_embedding"] = jax.random.normal(keys[1], (num_items, d), jnp.float32)
    p["wt"], p["bt"] = _linear_init(keys[2], FEAT_DIM, d)     # text_projection
    p["wv"], p["bv"] = _linear_init(keys[3], FEAT_DIM, d)     # visual_projection
    p["win"], p["bin"] = _linear_init(keys[4], d, 3 * d)      # attention in_proj (pre-T)
    p["wout"], p["bout"] = _linear_init(keys[5], d, d)        # attention out_proj (pre-T)
    p["wr1"], p["br1"] = _linear_init(keys[6], 2 * d, d)      # recommendation_net
    p["wr2"], p["br2"] = _linear_init(keys[7], d, 1)
    p["wd1"], p["bd1"] = _linear_init(keys[8], 2 * d, d)      # dpo_layer
    p["wd2"], p["bd2"] = _linear_init(keys[9], d, 1)
    p["wg1"], p["bg1"] = _linear_init(keys[10], 2 * d, d)     # generation_layer
    p["wg2"], p["bg2"] = _linear_init(keys[11], d, VOCAB_SIZE)
    return p


def _prep_fused_params(params):
    """Build fused / folded / padded bf16 weights consumed by the kernel."""
    f32 = jnp.float32
    bf16 = jnp.bfloat16
    d, hd = EMBED_DIM, HEAD_DIM

    win, bin_ = params["win"], params["bin"]
    wq, wk, wv = win[:, :d], win[:, d:2 * d], win[:, 2 * d:]
    bq, bk, bv = bin_[:, :d], bin_[:, d:2 * d], bin_[:, 2 * d:]
    wt, bt = params["wt"], params["bt"]
    wvp, bvp = params["wv"], params["bv"]

    # (256, 640) packed weight: cols [q_u|q_i | k_u|k_i|k_t|k_v | v_u|v_i|v_t|v_v];
    # text/vis rows pre-compose the modality projections (q_text/q_vis never used -> dropped).
    wbig = jnp.zeros((4 * d, 10 * d), f32)
    bbig = jnp.zeros((1, 10 * d), f32)
    wbig = wbig.at[0:d, 0:d].set(wq)
    wbig = wbig.at[d:2 * d, d:2 * d].set(wq)
    bbig = bbig.at[:, 0:d].set(bq)
    bbig = bbig.at[:, d:2 * d].set(bq)
    wbig = wbig.at[0:d, 2 * d:3 * d].set(wk)
    wbig = wbig.at[d:2 * d, 3 * d:4 * d].set(wk)
    wbig = wbig.at[2 * d:3 * d, 4 * d:5 * d].set(wt @ wk)
    wbig = wbig.at[3 * d:4 * d, 5 * d:6 * d].set(wvp @ wk)
    bbig = bbig.at[:, 2 * d:3 * d].set(bk)
    bbig = bbig.at[:, 3 * d:4 * d].set(bk)
    bbig = bbig.at[:, 4 * d:5 * d].set(bt @ wk + bk)
    bbig = bbig.at[:, 5 * d:6 * d].set(bvp @ wk + bk)
    wbig = wbig.at[0:d, 6 * d:7 * d].set(wv)
    wbig = wbig.at[d:2 * d, 7 * d:8 * d].set(wv)
    wbig = wbig.at[2 * d:3 * d, 8 * d:9 * d].set(wt @ wv)
    wbig = wbig.at[3 * d:4 * d, 9 * d:10 * d].set(wvp @ wv)
    bbig = bbig.at[:, 6 * d:7 * d].set(bv)
    bbig = bbig.at[:, 7 * d:8 * d].set(bv)
    bbig = bbig.at[:, 8 * d:9 * d].set(bt @ wv + bv)
    bbig = bbig.at[:, 9 * d:10 * d].set(bvp @ wv + bv)

    # Attention indicator matrices (0/1, built once host-side).
    idx = jnp.arange(8 * d)                       # 512 = qi*256 + kj*64 + dim
    qi = idx // (4 * d)
    kj = (idx % (4 * d)) // d
    dd = idx % d
    h = dd // hd
    lcol = kj * 8 + qi * 4 + h
    l01 = (lcol[:, None] == jnp.arange(32)[None, :]).astype(f32)      # (512, 32)
    lind = l01 * (1.0 / (hd ** 0.5))              # fold 1/sqrt(head_dim) (exact in bf16)
    eind = l01.T                                  # (32, 512) exact prob-expansion copy
    sind = ((qi[:, None] * d + dd[:, None])
            == jnp.arange(2 * d)[None, :]).astype(f32)                # (512, 128) key-group sum

    # Fused head-1 weight with out_proj composed in (attn only feeds w1 pre-ReLU).
    wout, bout = params["wout"], params["bout"]
    w1 = jnp.concatenate([params["wr1"], params["wd1"], params["wg1"]], axis=1)   # (128, 192)
    b1 = jnp.concatenate([params["br1"], params["bd1"], params["bg1"]], axis=1)   # (1, 192)
    w1_top, w1_bot = w1[:d, :], w1[d:, :]
    w1p = jnp.concatenate([wout @ w1_top, wout @ w1_bot], axis=0)                 # (128, 192)
    b1p = b1 + bout @ (w1_top + w1_bot)                                           # (1, 192)

    # Block-diagonal rec/dpo second layer.
    wrd = jnp.zeros((2 * d, 2), f32)
    wrd = wrd.at[:d, 0:1].set(params["wr2"])
    wrd = wrd.at[d:, 1:2].set(params["wd2"])
    brd = jnp.concatenate([params["br2"], params["bd2"]], axis=1)                 # (1, 2)

    # Generation second layer, vocab padded to 1024 (zero weight/bias in pad lanes).
    vpad = VOCAB_PAD - VOCAB_SIZE
    wg2 = jnp.pad(params["wg2"], ((0, 0), (0, vpad)))
    bg2 = jnp.pad(params["bg2"], ((0, 0), (0, vpad)))

    return (
        wbig.astype(bf16), bbig,
        lind.astype(bf16), eind.astype(bf16), sind.astype(bf16),
        w1p.astype(bf16), b1p,
        wrd.astype(bf16), brd,
        wg2.astype(bf16), bg2,
    )


def mig_dpg_forward(params, users, items, text_features, visual_features,
                    mode="recommend", block_b=512):
    # embedding lookups (glue, plain JAX gather)
    user_emb = jnp.take(params["user_embedding"], users, axis=0)
    item_emb = jnp.take(params["item_embedding"], items, axis=0)
    B = users.shape[0]

    weights = _prep_fused_params(params)

    # One lane-packed (B, 256) activation stream.
    x = jnp.concatenate(
        [user_emb, item_emb,
         text_features.astype(jnp.float32), visual_features.astype(jnp.float32)],
        axis=1)

    # Batch tiling: TB multiple of 8; force >= 2 grid steps when possible so both
    # v7x TensorCores get work under the "parallel" batch axis.
    block_b = _round_up(max(block_b, 8), 8)
    TB = min(block_b, _round_up(B, 8))
    if _round_up(B, TB) <= TB and B > 8:
        TB = _round_up((B + 1) // 2, 8)
    padded_B = _round_up(B, TB)
    pad = padded_B - B
    if pad:
        x = jnp.pad(x, ((0, pad), (0, 0)))

    in_specs = [pl.BlockSpec((TB, 4 * EMBED_DIM), lambda i: (i, 0))] + \
               [pl.BlockSpec(w.shape, lambda i: (0, 0)) for w in weights]
    out_specs = (pl.BlockSpec((TB, 2), lambda i: (i, 0)),
                 pl.BlockSpec((TB, VOCAB_PAD), lambda i: (i, 0)))
    out_shape = (jax.ShapeDtypeStruct((padded_B, 2), jnp.float32),
                 jax.ShapeDtypeStruct((padded_B, VOCAB_PAD), jnp.float32))

    per_row_macs = (256 * 640          # packed proj + QKV
                    + 512 * 32         # logits indicator
                    + 32 * 512         # prob expansion indicator
                    + 512 * 128        # key-group sum
                    + 128 * 192        # fused head-1 (out_proj folded)
                    + 128 * 2          # rec/dpo head-2
                    + 64 * VOCAB_PAD)  # generation head-2
    weight_bytes = sum(int(w.size) * w.dtype.itemsize for w in weights)
    cost = pl.CostEstimate(
        flops=int(2 * padded_B * per_row_macs),
        transcendentals=int(padded_B * 2 * NUM_HEADS * 4),
        bytes_accessed=int(padded_B * (256 + 2 + VOCAB_PAD) * 4 + weight_bytes),
    )

    rd, gen = pl.pallas_call(
        _mig_dpg_kernel,
        grid=(padded_B // TB,),
        out_shape=out_shape,
        in_specs=in_specs,
        out_specs=out_specs,
        compiler_params=pltpu.CompilerParams(
            dimension_semantics=("parallel",),
            vmem_limit_bytes=48 * 1024 * 1024),
        cost_estimate=cost,
    )(x, *weights)

    rec_scores = rd[:B, 0]
    dpo_scores = rd[:B, 1]
    gen_logits = gen[:B, :VOCAB_SIZE]

    if mode == "recommend":
        return rec_scores
    elif mode == "dpo":
        return dpo_scores
    elif mode == "generate":
        return gen_logits
    else:
        return {
            "recommendation_scores": rec_scores,
            "dpo_scores": dpo_scores,
            "generation_logits": gen_logits,
        }


if __name__ == "__main__":
    key = jax.random.PRNGKey(0)
    k_param, k_users, k_items, k_text, k_vis = jax.random.split(key, 5)

    num_users, num_items, batch = 32, 48, 2
    params = init_params(k_param, num_users, num_items)

    users = jax.random.randint(k_users, (batch,), 0, num_users, dtype=jnp.int32)
    items = jax.random.randint(k_items, (batch,), 0, num_items, dtype=jnp.int32)
    # In the PyTorch module these are torch.randn(...) drawn inside forward;
    # here they are generated deterministically and passed in.
    text_features = jax.random.normal(k_text, (batch, FEAT_DIM), jnp.float32)
    visual_features = jax.random.normal(k_vis, (batch, FEAT_DIM), jnp.float32)

    out = mig_dpg_forward(params, users, items, text_features, visual_features, mode="all")
    out = jax.block_until_ready(out)

    assert out["recommendation_scores"].shape == (batch,)
    assert out["dpo_scores"].shape == (batch,)
    assert out["generation_logits"].shape == (batch, VOCAB_SIZE)
    assert all(bool(jnp.all(jnp.isfinite(v))) for v in out.values())
    print("KERNEL_OK")
</pallas_src>

<mosaic_0001>
module attributes {stable_mosaic.version = 11 : i64} {
  func.func @_mig_dpg_kernel(%arg0: i32, %arg1: memref<8x256xf32, #tpu.memory_space<vmem>>, %arg2: memref<256x640xbf16, #tpu.memory_space<vmem>>, %arg3: memref<1x640xf32, #tpu.memory_space<vmem>>, %arg4: memref<512x32xbf16, #tpu.memory_space<vmem>>, %arg5: memref<32x512xbf16, #tpu.memory_space<vmem>>, %arg6: memref<512x128xbf16, #tpu.memory_space<vmem>>, %arg7: memref<128x192xbf16, #tpu.memory_space<vmem>>, %arg8: memref<1x192xf32, #tpu.memory_space<vmem>>, %arg9: memref<128x2xbf16, #tpu.memory_space<vmem>>, %arg10: memref<1x2xf32, #tpu.memory_space<vmem>>, %arg11: memref<64x1024xbf16, #tpu.memory_space<vmem>>, %arg12: memref<1x1024xf32, #tpu.memory_space<vmem>>, %arg13: memref<8x2xf32, #tpu.memory_space<vmem>>, %arg14: memref<8x1024xf32, #tpu.memory_space<vmem>>) attributes {dimension_semantics = [#tpu.dimension_semantics<parallel>], iteration_bounds = array<i64: 1>, scalar_prefetch = 0 : i64, scratch_operands = 0 : i64, tpu.core_type = #tpu.core_type<tc>, window_params = [{transform_indices = @transform_0, window_bounds = array<i64: 8, 256>}, {pipeline_mode = #tpu.pipeline_mode<synchronous>, transform_indices = @transform_1, window_bounds = array<i64: 256, 640>}, {pipeline_mode = #tpu.pipeline_mode<synchronous>, transform_indices = @transform_2, window_bounds = array<i64: 1, 640>}, {pipeline_mode = #tpu.pipeline_mode<synchronous>, transform_indices = @transform_3, window_bounds = array<i64: 512, 32>}, {pipeline_mode = #tpu.pipeline_mode<synchronous>, transform_indices = @transform_4, window_bounds = array<i64: 32, 512>}, {pipeline_mode = #tpu.pipeline_mode<synchronous>, transform_indices = @transform_5, window_bounds = array<i64: 512, 128>}, {pipeline_mode = #tpu.pipeline_mode<synchronous>, transform_indices = @transform_6, window_bounds = array<i64: 128, 192>}, {pipeline_mode = #tpu.pipeline_mode<synchronous>, transform_indices = @transform_7, window_bounds = array<i64: 1, 192>}, {pipeline_mode = #tpu.pipeline_mode<synchronous>, transform_indices = @transform_8, window_bounds = array<i64: 128, 2>}, {pipeline_mode = #tpu.pipeline_mode<synchronous>, transform_indices = @transform_9, window_bounds = array<i64: 1, 2>}, {pipeline_mode = #tpu.pipeline_mode<synchronous>, transform_indices = @transform_10, window_bounds = array<i64: 64, 1024>}, {pipeline_mode = #tpu.pipeline_mode<synchronous>, transform_indices = @transform_11, window_bounds = array<i64: 1, 1024>}, {transform_indices = @transform_12, window_bounds = array<i64: 8, 2>}, {transform_indices = @transform_13, window_bounds = array<i64: 8, 1024>}]} {
    %c0 = arith.constant 0 : index
    %c0_0 = arith.constant 0 : index
    %0 = vector.load %arg1[%c0, %c0_0] : memref<8x256xf32, #tpu.memory_space<vmem>>, vector<8x256xf32>
    %1 = arith.truncf %0 : vector<8x256xf32> to vector<8x256xbf16>
    %c0_1 = arith.constant 0 : index
    %c0_2 = arith.constant 0 : index
    %2 = vector.load %arg2[%c0_1, %c0_2] : memref<256x640xbf16, #tpu.memory_space<vmem>>, vector<256x640xbf16>
    %cst = arith.constant dense<0.000000e+00> : vector<8x640xf32>
    %3 = tpu.matmul %1, %2, %cst {dimension_numbers = #tpu.dot_dimension_numbers<[1], [0], [0], [1], [0, 0, 1, 1], [], []>} : vector<8x256xbf16>, vector<256x640xbf16>, vector<8x640xf32> -> vector<8x640xf32>
    %c0_3 = arith.constant 0 : index
    %c0_4 = arith.constant 0 : index
    %4 = vector.load %arg3[%c0_3, %c0_4] : memref<1x640xf32, #tpu.memory_space<vmem>>, vector<1x640xf32>
    %5 = vector.broadcast %4 : vector<1x640xf32> to vector<8x640xf32>
    %6 = arith.addf %3, %5 : vector<8x640xf32>
    %7 = vector.extract_strided_slice %6 {offsets = [0, 0], sizes = [8, 64], strides = [1, 1]} : vector<8x640xf32> to vector<8x64xf32>
    %8 = vector.extract_strided_slice %6 {offsets = [0, 64], sizes = [8, 64], strides = [1, 1]} : vector<8x640xf32> to vector<8x64xf32>
    %9 = vector.extract_strided_slice %6 {offsets = [0, 128], sizes = [8, 256], strides = [1, 1]} : vector<8x640xf32> to vector<8x256xf32>
    %10 = vector.extract_strided_slice %6 {offsets = [0, 384], sizes = [8, 256], strides = [1, 1]} : vector<8x640xf32> to vector<8x256xf32>
    %11 = tpu.concatenate %7, %7, %7, %7 in 1 : vector<8x64xf32>, vector<8x64xf32>, vector<8x64xf32>, vector<8x64xf32> -> vector<8x256xf32>
    %12 = tpu.concatenate %8, %8, %8, %8 in 1 : vector<8x64xf32>, vector<8x64xf32>, vector<8x64xf32>, vector<8x64xf32> -> vector<8x256xf32>
    %13 = arith.mulf %11, %9 : vector<8x256xf32>
    %14 = arith.mulf %12, %9 : vector<8x256xf32>
    %15 = tpu.concatenate %13, %14 in 1 : vector<8x256xf32>, vector<8x256xf32> -> vector<8x512xf32>
    %16 = arith.truncf %15 : vector<8x512xf32> to vector<8x512xbf16>
    %c0_5 = arith.constant 0 : index
    %c0_6 = arith.constant 0 : index
    %17 = vector.load %arg4[%c0_5, %c0_6] : memref<512x32xbf16, #tpu.memory_space<vmem>>, vector<512x32xbf16>
    %cst_7 = arith.constant dense<0.000000e+00> : vector<8x32xf32>
    %18 = tpu.matmul %16, %17, %cst_7 {dimension_numbers = #tpu.dot_dimension_numbers<[1], [0], [0], [1], [0, 0, 1, 1], [], []>} : vector<8x512xbf16>, vector<512x32xbf16>, vector<8x32xf32> -> vector<8x32xf32>
    %19 = vector.extract_strided_slice %18 {offsets = [0, 0], sizes = [8, 8], strides = [1, 1]} : vector<8x32xf32> to vector<8x8xf32>
    %20 = vector.extract_strided_slice %18 {offsets = [0, 8], sizes = [8, 8], strides = [1, 1]} : vector<8x32xf32> to vector<8x8xf32>
    %21 = vector.extract_strided_slice %18 {offsets = [0, 16], sizes = [8, 8], strides = [1, 1]} : vector<8x32xf32> to vector<8x8xf32>
    %22 = vector.extract_strided_slice %18 {offsets = [0, 24], sizes = [8, 8], strides = [1, 1]} : vector<8x32xf32> to vector<8x8xf32>
    %23 = arith.maximumf %19, %20 : vector<8x8xf32>
    %24 = arith.maximumf %21, %22 : vector<8x8xf32>
    %25 = arith.maximumf %23, %24 : vector<8x8xf32>
    %26 = arith.subf %19, %25 : vector<8x8xf32>
    %27 = math.exp %26 : vector<8x8xf32>
    %28 = arith.subf %20, %25 : vector<8x8xf32>
    %29 = math.exp %28 : vector<8x8xf32>
    %30 = arith.subf %21, %25 : vector<8x8xf32>
    %31 = math.exp %30 : vector<8x8xf32>
    %32 = arith.subf %22, %25 : vector<8x8xf32>
    %33 = math.exp %32 : vector<8x8xf32>
    %34 = arith.addf %27, %29 : vector<8x8xf32>
    %35 = arith.addf %34, %31 : vector<8x8xf32>
    %36 = arith.addf %35, %33 : vector<8x8xf32>
    %cst_8 = arith.constant 1.000000e+00 : f32
    %37 = vector.broadcast %cst_8 : f32 to vector<8x8xf32>
    %38 = arith.divf %37, %36 : vector<8x8xf32>
    %39 = arith.mulf %27, %38 : vector<8x8xf32>
    %40 = arith.mulf %29, %38 : vector<8x8xf32>
    %41 = arith.mulf %31, %38 : vector<8x8xf32>
    %42 = arith.mulf %33, %38 : vector<8x8xf32>
    %43 = tpu.concatenate %39, %40, %41, %42 in 1 : vector<8x8xf32>, vector<8x8xf32>, vector<8x8xf32>, vector<8x8xf32> -> vector<8x32xf32>
    %44 = arith.truncf %43 : vector<8x32xf32> to vector<8x32xbf16>
    %c0_9 = arith.constant 0 : index
    %c0_10 = arith.constant 0 : index
    %45 = vector.load %arg5[%c0_9, %c0_10] : memref<32x512xbf16, #tpu.memory_space<vmem>>, vector<32x512xbf16>
    %cst_11 = arith.constant dense<0.000000e+00> : vector<8x512xf32>
    %46 = tpu.matmul %44, %45, %cst_11 {dimension_numbers = #tpu.dot_dimension_numbers<[1], [0], [0], [1], [0, 0, 1, 1], [], []>} : vector<8x32xbf16>, vector<32x512xbf16>, vector<8x512xf32> -> vector<8x512xf32>
    %47 = tpu.concatenate %10, %10 in 1 : vector<8x256xf32>, vector<8x256xf32> -> vector<8x512xf32>
    %48 = arith.mulf %46, %47 : vector<8x512xf32>
    %49 = arith.truncf %48 : vector<8x512xf32> to vector<8x512xbf16>
    %c0_12 = arith.constant 0 : index
    %c0_13 = arith.constant 0 : index
    %50 = vector.load %arg6[%c0_12, %c0_13] : memref<512x128xbf16, #tpu.memory_space<vmem>>, vector<512x128xbf16>
    %cst_14 = arith.constant dense<0.000000e+00> : vector<8x128xf32>
    %51 = tpu.matmul %49, %50, %cst_14 {dimension_numbers = #tpu.dot_dimension_numbers<[1], [0], [0], [1], [0, 0, 1, 1], [], []>} : vector<8x512xbf16>, vector<512x128xbf16>, vector<8x128xf32> -> vector<8x128xf32>
    %52 = arith.truncf %51 : vector<8x128xf32> to vector<8x128xbf16>
    %c0_15 = arith.constant 0 : index
    %c0_16 = arith.constant 0 : index
    %53 = vector.load %arg7[%c0_15, %c0_16] : memref<128x192xbf16, #tpu.memory_space<vmem>>, vector<128x192xbf16>
    %cst_17 = arith.constant dense<0.000000e+00> : vector<8x192xf32>
    %54 = tpu.matmul %52, %53, %cst_17 {dimension_numbers = #tpu.dot_dimension_numbers<[1], [0], [0], [1], [0, 0, 1, 1], [], []>} : vector<8x128xbf16>, vector<128x192xbf16>, vector<8x192xf32> -> vector<8x192xf32>
    %c0_18 = arith.constant 0 : index
    %c0_19 = arith.constant 0 : index
    %55 = vector.load %arg8[%c0_18, %c0_19] : memref<1x192xf32, #tpu.memory_space<vmem>>, vector<1x192xf32>
    %56 = vector.broadcast %55 : vector<1x192xf32> to vector<8x192xf32>
    %57 = arith.addf %54, %56 : vector<8x192xf32>
    %cst_20 = arith.constant 0.000000e+00 : f32
    %58 = vector.broadcast %cst_20 : f32 to vector<8x192xf32>
    %59 = arith.maximumf %57, %58 : vector<8x192xf32>
    %60 = vector.extract_strided_slice %59 {offsets = [0, 0], sizes = [8, 128], strides = [1, 1]} : vector<8x192xf32> to vector<8x128xf32>
    %61 = arith.truncf %60 : vector<8x128xf32> to vector<8x128xbf16>
    %c0_21 = arith.constant 0 : index
    %c0_22 = arith.constant 0 : index
    %62 = vector.load %arg9[%c0_21, %c0_22] : memref<128x2xbf16, #tpu.memory_space<vmem>>, vector<128x2xbf16>
    %cst_23 = arith.constant dense<0.000000e+00> : vector<8x2xf32>
    %63 = tpu.matmul %61, %62, %cst_23 {dimension_numbers = #tpu.dot_dimension_numbers<[1], [0], [0], [1], [0, 0, 1, 1], [], []>} : vector<8x128xbf16>, vector<128x2xbf16>, vector<8x2xf32> -> vector<8x2xf32>
    %c0_24 = arith.constant 0 : index
    %c0_25 = arith.constant 0 : index
    %64 = vector.load %arg10[%c0_24, %c0_25] : memref<1x2xf32, #tpu.memory_space<vmem>>, vector<1x2xf32>
    %65 = vector.broadcast %64 : vector<1x2xf32> to vector<8x2xf32>
    %66 = arith.addf %63, %65 : vector<8x2xf32>
    %c0_26 = arith.constant 0 : index
    %c0_27 = arith.constant 0 : index
    %67 = vector.load %arg13[%c0_26, %c0_27] : memref<8x2xf32, #tpu.memory_space<vmem>>, vector<8x2xf32>
    tpu.vector_store %arg13[%c0_26, %c0_27], %66 {strides = array<i32>} : memref<8x2xf32, #tpu.memory_space<vmem>>, vector<8x2xf32>,
    %68 = vector.extract_strided_slice %59 {offsets = [0, 128], sizes = [8, 64], strides = [1, 1]} : vector<8x192xf32> to vector<8x64xf32>
    %69 = arith.truncf %68 : vector<8x64xf32> to vector<8x64xbf16>
    %c0_28 = arith.constant 0 : index
    %c0_29 = arith.constant 0 : index
    %70 = vector.load %arg11[%c0_28, %c0_29] : memref<64x1024xbf16, #tpu.memory_space<vmem>>, vector<64x1024xbf16>
    %cst_30 = arith.constant dense<0.000000e+00> : vector<8x1024xf32>
    %71 = tpu.matmul %69, %70, %cst_30 {dimension_numbers = #tpu.dot_dimension_numbers<[1], [0], [0], [1], [0, 0, 1, 1], [], []>} : vector<8x64xbf16>, vector<64x1024xbf16>, vector<8x1024xf32> -> vector<8x1024xf32>
    %c0_31 = arith.constant 0 : index
    %c0_32 = arith.constant 0 : index
    %72 = vector.load %arg12[%c0_31, %c0_32] : memref<1x1024xf32, #tpu.memory_space<vmem>>, vector<1x1024xf32>
    %73 = vector.broadcast %72 : vector<1x1024xf32> to vector<8x1024xf32>
    %74 = arith.addf %71, %73 : vector<8x1024xf32>
    %c0_33 = arith.constant 0 : index
    %c0_34 = arith.constant 0 : index
    %75 = vector.load %arg14[%c0_33, %c0_34] : memref<8x1024xf32, #tpu.memory_space<vmem>>, vector<8x1024xf32>
    tpu.vector_store %arg14[%c0_33, %c0_34], %74 {strides = array<i32>} : memref<8x1024xf32, #tpu.memory_space<vmem>>, vector<8x1024xf32>,
    return
  }
  func.func @transform_0(%arg0: i32) -> (i32, i32) {
    %c0_i32 = arith.constant 0 : i32
    %c0_i32_0 = arith.constant 0 : i32
    return %arg0, %c0_i32 : i32, i32
  }
  func.func @transform_1(%arg0: i32) -> (i32, i32) {
    %c0_i32 = arith.constant 0 : i32
    %c0_i32_0 = arith.constant 0 : i32
    %c0_i32_1 = arith.constant 0 : i32
    return %c0_i32, %c0_i32_0 : i32, i32
  }
  func.func @transform_2(%arg0: i32) -> (i32, i32) {
    %c0_i32 = arith.constant 0 : i32
    %c0_i32_0 = arith.constant 0 : i32
    %c0_i32_1 = arith.constant 0 : i32
    return %c0_i32, %c0_i32_0 : i32, i32
  }
  func.func @transform_3(%arg0: i32) -> (i32, i32) {
    %c0_i32 = arith.constant 0 : i32
    %c0_i32_0 = arith.constant 0 : i32
    %c0_i32_1 = arith.constant 0 : i32
    return %c0_i32, %c0_i32_0 : i32, i32
  }
  func.func @transform_4(%arg0: i32) -> (i32, i32) {
    %c0_i32 = arith.constant 0 : i32
    %c0_i32_0 = arith.constant 0 : i32
    %c0_i32_1 = arith.constant 0 : i32
    return %c0_i32, %c0_i32_0 : i32, i32
  }
  func.func @transform_5(%arg0: i32) -> (i32, i32) {
    %c0_i32 = arith.constant 0 : i32
    %c0_i32_0 = arith.constant 0 : i32
    %c0_i32_1 = arith.constant 0 : i32
    return %c0_i32, %c0_i32_0 : i32, i32
  }
  func.func @transform_6(%arg0: i32) -> (i32, i32) {
    %c0_i32 = arith.constant 0 : i32
    %c0_i32_0 = arith.constant 0 : i32
    %c0_i32_1 = arith.constant 0 : i32
    return %c0_i32, %c0_i32_0 : i32, i32
  }
  func.func @transform_7(%arg0: i32) -> (i32, i32) {
    %c0_i32 = arith.constant 0 : i32
    %c0_i32_0 = arith.constant 0 : i32
    %c0_i32_1 = arith.constant 0 : i32
    return %c0_i32, %c0_i32_0 : i32, i32
  }
  func.func @transform_8(%arg0: i32) -> (i32, i32) {
    %c0_i32 = arith.constant 0 : i32
    %c0_i32_0 = arith.constant 0 : i32
    %c0_i32_1 = arith.constant 0 : i32
    return %c0_i32, %c0_i32_0 : i32, i32
  }
  func.func @transform_9(%arg0: i32) -> (i32, i32) {
    %c0_i32 = arith.constant 0 : i32
    %c0_i32_0 = arith.constant 0 : i32
    %c0_i32_1 = arith.constant 0 : i32
    return %c0_i32, %c0_i32_0 : i32, i32
  }
  func.func @transform_10(%arg0: i32) -> (i32, i32) {
    %c0_i32 = arith.constant 0 : i32
    %c0_i32_0 = arith.constant 0 : i32
    %c0_i32_1 = arith.constant 0 : i32
    return %c0_i32, %c0_i32_0 : i32, i32
  }
  func.func @transform_11(%arg0: i32) -> (i32, i32) {
    %c0_i32 = arith.constant 0 : i32
    %c0_i32_0 = arith.constant 0 : i32
    %c0_i32_1 = arith.constant 0 : i32
    return %c0_i32, %c0_i32_0 : i32, i32
  }
  func.func @transform_12(%arg0: i32) -> (i32, i32) {
    %c0_i32 = arith.constant 0 : i32
    %c0_i32_0 = arith.constant 0 : i32
    return %arg0, %c0_i32 : i32, i32
  }
  func.func @transform_13(%arg0: i32) -> (i32, i32) {
    %c0_i32 = arith.constant 0 : i32
    %c0_i32_0 = arith.constant 0 : i32
    return %arg0, %c0_i32 : i32, i32
  }
}

</mosaic_0001>

<llo_original>
// kernel: tpu_custom_call.1
$region0: #{tpu_custom_call.1}
  #allocation0 [shape = 'u32[]', space=smem, size = 0x4, offset = 0x4, fixed_abs, tag = 'smem constant byte address 0x4 - core index']
  #allocation1 [shape = 'u32[144,128]{1,0:T(1,128)}', space=vmem, size = 0x12000, scoped, tag = 'internal scratch']
  %s0 = inlined_call_operand.vmem [shape: f32[8,256], index: 0, kind: input, shape index: {}]
  %s1 = inlined_call_operand.hbm [shape: bf16[256,640], index: 1, kind: input, shape index: {}]
  %s2 = inlined_call_operand.vmem [shape: f32[1,640], index: 2, kind: input, shape index: {}]
  %s3 = inlined_call_operand.vmem [shape: bf16[512,32], index: 3, kind: input, shape index: {}]
  %s4 = inlined_call_operand.hbm [shape: bf16[32,512], index: 4, kind: input, shape index: {}]
  %s5 = inlined_call_operand.vmem [shape: bf16[512,128], index: 5, kind: input, shape index: {}]
  %s6 = inlined_call_operand.vmem [shape: bf16[128,192], index: 6, kind: input, shape index: {}]
  %s7 = inlined_call_operand.vmem [shape: f32[1,192], index: 7, kind: input, shape index: {}]
  %s8 = inlined_call_operand.vmem [shape: bf16[128,2], index: 8, kind: input, shape index: {}]
  %s9 = inlined_call_operand.vmem [shape: f32[1,2], index: 9, kind: input, shape index: {}]
  %s10 = inlined_call_operand.vmem [shape: bf16[64,1024], index: 10, kind: input, shape index: {}]
  %s11 = inlined_call_operand.vmem [shape: f32[1,1024], index: 11, kind: input, shape index: {}]
  %s12 = inlined_call_operand.vmem [shape: f32[8,2], index: 12, kind: output, shape index: {0}]
  %s13 = inlined_call_operand.hbm [shape: f32[8,1024], index: 13, kind: output, shape index: {1}]
  %14 = xla_tuple %s12, %s13
  %s15 = sld [smem:[#allocation0]]
  $region74: #{tpu_custom_call.1} parent=0
    _
  %s17 = ssub.s32 1, %s15
  %s18 = scalar_select 0, %s17, %s15
  $region1: #{tpu_custom_call.1} parent=0
    #allocation2 [shape = 'u8[327680]{0}', space=vmem, size = 0x50000, scoped, tag = 'input window, operand 1, single buffered']
    #allocation3 [shape = 's32[1]{0}', space=sflag, size = 0x4, scoped, tag = 'scoped memory for tpu_custom_call.1']
    #allocation4 [shape = 's32[1]{0}', space=sflag, size = 0x4, scoped, tag = 'scoped memory for tpu_custom_call.1']
    #allocation5 [shape = 'u8[32768]{0}', space=vmem, size = 0x8000, scoped, tag = 'input window, operand 4, single buffered']
    #allocation6 [shape = 's32[1]{0}', space=sflag, size = 0x4, scoped, tag = 'scoped memory for tpu_custom_call.1']
    #allocation7 [shape = 'u8[32768]{0}', space=vmem, size = 0x8000, scoped, tag = 'output window, operand 1, single buffered']
    %19 = vsyncpa [#allocation3], 0
    %20 = vsyncpa [#allocation6], 0
    %21 = vsyncpa [#allocation4], 0
    // Predicated region
    $region2: #{tpu_custom_call.1} parent=1 // pred_check
      _
    $region3: #{tpu_custom_call.1} parent=1 // pred_check_branch
      %23 = sbr.rel (0) target = $region5
    $region4: #{tpu_custom_call.1} parent=1 // pred_region
      _
    $region5: #{tpu_custom_call.1} parent=1 // pred_fallthru
      _
    // Predicated region
    $region6: #{tpu_custom_call.1} parent=1 // pred_check
      _
    $region7: #{tpu_custom_call.1} parent=1 // pred_check_branch
      %25 = sbr.rel (0) target = $region9
    $region8: #{tpu_custom_call.1} parent=1 // pred_region
      %s27 = ssub.s32 10240, 10240
      %28 = vsyncadd [#allocation3], %s27
      %s29 = sshll.u32 [#allocation2], 4
      %s30 = int_to_ptr.vmem [resolvable:$true] %s29
      %35 = dma.hbm_to_vmem [thread:$0]  %s1, 10240, %s30, [#allocation3], 320, 320, 20
    $region9: #{tpu_custom_call.1} parent=1 // pred_fallthru
      _
    // Predicated region
    $region10: #{tpu_custom_call.1} parent=1 // pred_check
      _
    $region11: #{tpu_custom_call.1} parent=1 // pred_check_branch
      %37 = sbr.rel (0) target = $region13
    $region12: #{tpu_custom_call.1} parent=1 // pred_region
      _
    $region13: #{tpu_custom_call.1} parent=1 // pred_fallthru
      _
    // Predicated region
    $region14: #{tpu_custom_call.1} parent=1 // pred_check
      _
    $region15: #{tpu_custom_call.1} parent=1 // pred_check_branch
      %39 = sbr.rel (0) target = $region17
    $region16: #{tpu_custom_call.1} parent=1 // pred_region
      _
    $region17: #{tpu_custom_call.1} parent=1 // pred_fallthru
      _
    // Predicated region
    $region18: #{tpu_custom_call.1} parent=1 // pred_check
      _
    $region19: #{tpu_custom_call.1} parent=1 // pred_check_branch
      %41 = sbr.rel (0) target = $region21
    $region20: #{tpu_custom_call.1} parent=1 // pred_region
      %s43 = ssub.s32 1024, 1024
      %44 = vsyncadd [#allocation6], %s43
      %s45 = sshll.u32 [#allocation5], 4
      %s46 = int_to_ptr.vmem [resolvable:$true] %s45
      %51 = dma.hbm_to_vmem [thread:$0]  %s4, 1024, %s46, [#allocation6], 256, 256, 16
    $region21: #{tpu_custom_call.1} parent=1 // pred_fallthru
      _
    // Predicated region
    $region22: #{tpu_custom_call.1} parent=1 // pred_check
      _
    $region23: #{tpu_custom_call.1} parent=1 // pred_check_branch
      %53 = sbr.rel (0) target = $region25
    $region24: #{tpu_custom_call.1} parent=1 // pred_region
      _
    $region25: #{tpu_custom_call.1} parent=1 // pred_fallthru
      _
    // Predicated region
    $region26: #{tpu_custom_call.1} parent=1 // pred_check
      _
    $region27: #{tpu_custom_call.1} parent=1 // pred_check_branch
      %55 = sbr.rel (0) target = $region29
    $region28: #{tpu_custom_call.1} parent=1 // pred_region
      _
    $region29: #{tpu_custom_call.1} parent=1 // pred_fallthru
      _
    // Predicated region
    $region30: #{tpu_custom_call.1} parent=1 // pred_check
      _
    $region31: #{tpu_custom_call.1} parent=1 // pred_check_branch
      %57 = sbr.rel (0) target = $region33
    $region32: #{tpu_custom_call.1} parent=1 // pred_region
      _
    $region33: #{tpu_custom_call.1} parent=1 // pred_fallthru
      _
    // Predicated region
    $region34: #{tpu_custom_call.1} parent=1 // pred_check
      _
    $region35: #{tpu_custom_call.1} parent=1 // pred_check_branch
      %59 = sbr.rel (0) target = $region37
    $region36: #{tpu_custom_call.1} parent=1 // pred_region
      _
    $region37: #{tpu_custom_call.1} parent=1 // pred_fallthru
      _
    // Predicated region
    $region38: #{tpu_custom_call.1} parent=1 // pred_check
      _
    $region39: #{tpu_custom_call.1} parent=1 // pred_check_branch
      %61 = sbr.rel (0) target = $region41
    $region40: #{tpu_custom_call.1} parent=1 // pred_region
      _
    $region41: #{tpu_custom_call.1} parent=1 // pred_fallthru
      _
    // Predicated region
    $region42: #{tpu_custom_call.1} parent=1 // pred_check
      _
    $region43: #{tpu_custom_call.1} parent=1 // pred_check_branch
      %63 = sbr.rel (0) target = $region45
    $region44: #{tpu_custom_call.1} parent=1 // pred_region
      _
    $region45: #{tpu_custom_call.1} parent=1 // pred_fallthru
      _
    // Predicated region
    $region46: #{tpu_custom_call.1} parent=1 // pred_check
      _
    $region47: #{tpu_custom_call.1} parent=1 // pred_check_branch
      %65 = sbr.rel (0) target = $region49
    $region48: #{tpu_custom_call.1} parent=1 // pred_region
      _
    $region49: #{tpu_custom_call.1} parent=1 // pred_fallthru
      _
    // Predicated region
    $region50: #{tpu_custom_call.1} parent=1 // pred_check
      _
    $region51: #{tpu_custom_call.1} parent=1 // pred_check_branch
      %67 = sbr.rel (0) target = $region53
    $region52: #{tpu_custom_call.1} parent=1 // pred_region
      %68 = dma.done [#allocation3], 10240
    $region53: #{tpu_custom_call.1} parent=1 // pred_fallthru
      _
    // Predicated region
    $region54: #{tpu_custom_call.1} parent=1 // pred_check
      _
    $region55: #{tpu_custom_call.1} parent=1 // pred_check_branch
      %70 = sbr.rel (0) target = $region57
    $region56: #{tpu_custom_call.1} parent=1 // pred_region
      %71 = dma.done [#allocation6], 1024
    $region57: #{tpu_custom_call.1} parent=1 // pred_fallthru
      _
    %v73 = vld [vmem:[%s0] sm:$0xff]
    %v74 = vld [vmem:[%s0 + $0x8] sm:$0xff]
    %v75 = vpack.c.bf16 %v73, %v73
    %v76 = vpack.c.bf16 %v74, %v74
    %v77 = vld [vmem:[#allocation2] sm:$0xff]
    %v78 = vld [vmem:[#allocation2 + $0x8] sm:$0xff]
    %v79 = vld [vmem:[#allocation2 + $0x10] sm:$0xf]
    %v80 = vld [vmem:[#allocation2 + $0x14] sm:$0xff]
    %v81 = vld [vmem:[#allocation2 + $0x1c] sm:$0xff]
    %v82 = vld [vmem:[#allocation2 + $0x24] sm:$0xf]
    %v83 = vld [vmem:[#allocation2 + $0x28] sm:$0xff]
    %v84 = vld [vmem:[#allocation2 + $0x30] sm:$0xff]
    %v85 = vld [vmem:[#allocation2 + $0x38] sm:$0xf]
    %v86 = vld [vmem:[#allocation2 + $0x3c] sm:$0xff]
    %v87 = vld [vmem:[#allocation2 + $0x44] sm:$0xff]
    %v88 = vld [vmem:[#allocation2 + $0x4c] sm:$0xf]
    %v89 = vld [vmem:[#allocation2 + $0x50] sm:$0xff]
    %v90 = vld [vmem:[#allocation2 + $0x58] sm:$0xff]
    %v91 = vld [vmem:[#allocation2 + $0x60] sm:$0xf]
    %v92 = vld [vmem:[#allocation2 + $0x64] sm:$0xff]
    %v93 = vld [vmem:[#allocation2 + $0x6c] sm:$0xff]
    %v94 = vld [vmem:[#allocation2 + $0x74] sm:$0xf]
    %v95 = vld [vmem:[#allocation2 + $0x78] sm:$0xff]
    %v96 = vld [vmem:[#allocation2 + $0x80] sm:$0xff]
    %v97 = vld [vmem:[#allocation2 + $0x88] sm:$0xf]
    %v98 = vld [vmem:[#allocation2 + $0x8c] sm:$0xff]
    %v99 = vld [vmem:[#allocation2 + $0x94] sm:$0xff]
    %v100 = vld [vmem:[#allocation2 + $0x9c] sm:$0xf]
    %v101 = vld [vmem:[#allocation2 + $0xa0] sm:$0xff]
    %v102 = vld [vmem:[#allocation2 + $0xa8] sm:$0xff]
    %v103 = vld [vmem:[#allocation2 + $0xb0] sm:$0xf]
    %v104 = vld [vmem:[#allocation2 + $0xb4] sm:$0xff]
    %v105 = vld [vmem:[#allocation2 + $0xbc] sm:$0xff]
    %v106 = vld [vmem:[#allocation2 + $0xc4] sm:$0xf]
    %v107 = vld [vmem:[#allocation2 + $0xc8] sm:$0xff]
    %v108 = vld [vmem:[#allocation2 + $0xd0] sm:$0xff]
    %v109 = vld [vmem:[#allocation2 + $0xd8] sm:$0xf]
    %v110 = vld [vmem:[#allocation2 + $0xdc] sm:$0xff]
    %v111 = vld [vmem:[#allocation2 + $0xe4] sm:$0xff]
    %v112 = vld [vmem:[#allocation2 + $0xec] sm:$0xf]
    %v113 = vld [vmem:[#allocation2 + $0xf0] sm:$0xff]
    %v114 = vld [vmem:[#allocation2 + $0xf8] sm:$0xff]
    %v115 = vld [vmem:[#allocation2 + $0x100] sm:$0xf]
    %v116 = vld [vmem:[#allocation2 + $0x104] sm:$0xff]
    %v117 = vld [vmem:[#allocation2 + $0x10c] sm:$0xff]
    %v118 = vld [vmem:[#allocation2 + $0x114] sm:$0xf]
    %v119 = vld [vmem:[#allocation2 + $0x118] sm:$0xff]
    %v120 = vld [vmem:[#allocation2 + $0x120] sm:$0xff]
    %v121 = vld [vmem:[#allocation2 + $0x128] sm:$0xf]
    %v122 = vld [vmem:[#allocation2 + $0x12c] sm:$0xff]
    %v123 = vld [vmem:[#allocation2 + $0x134] sm:$0xff]
    %v124 = vld [vmem:[#allocation2 + $0x13c] sm:$0xf]
    %v125 = vld [vmem:[#allocation2 + $0x140] sm:$0xff]
    %v126 = vld [vmem:[#allocation2 + $0x148] sm:$0xff]
    %v127 = vld [vmem:[#allocation2 + $0x150] sm:$0xf]
    %v128 = vld [vmem:[#allocation2 + $0x154] sm:$0xff]
    %v129 = vld [vmem:[#allocation2 + $0x15c] sm:$0xff]
    %v130 = vld [vmem:[#allocation2 + $0x164] sm:$0xf]
    %v131 = vld [vmem:[#allocation2 + $0x168] sm:$0xff]
    %v132 = vld [vmem:[#allocation2 + $0x170] sm:$0xff]
    %v133 = vld [vmem:[#allocation2 + $0x178] sm:$0xf]
    %v134 = vld [vmem:[#allocation2 + $0x17c] sm:$0xff]
    %v135 = vld [vmem:[#allocation2 + $0x184] sm:$0xff]
    %v136 = vld [vmem:[#allocation2 + $0x18c] sm:$0xf]
    %v137 = vld [vmem:[#allocation2 + $0x190] sm:$0xff]
    %v138 = vld [vmem:[#allocation2 + $0x198] sm:$0xff]
    %v139 = vld [vmem:[#allocation2 + $0x1a0] sm:$0xf]
    %v140 = vld [vmem:[#allocation2 + $0x1a4] sm:$0xff]
    %v141 = vld [vmem:[#allocation2 + $0x1ac] sm:$0xff]
    %v142 = vld [vmem:[#allocation2 + $0x1b4] sm:$0xf]
    %v143 = vld [vmem:[#allocation2 + $0x1b8] sm:$0xff]
    %v144 = vld [vmem:[#allocation2 + $0x1c0] sm:$0xff]
    %v145 = vld [vmem:[#allocation2 + $0x1c8] sm:$0xf]
    %v146 = vld [vmem:[#allocation2 + $0x1cc] sm:$0xff]
    %v147 = vld [vmem:[#allocation2 + $0x1d4] sm:$0xff]
    %v148 = vld [vmem:[#allocation2 + $0x1dc] sm:$0xf]
    %v149 = vld [vmem:[#allocation2 + $0x1e0] sm:$0xff]
    %v150 = vld [vmem:[#allocation2 + $0x1e8] sm:$0xff]
    %v151 = vld [vmem:[#allocation2 + $0x1f0] sm:$0xf]
    %v152 = vld [vmem:[#allocation2 + $0x1f4] sm:$0xff]
    %v153 = vld [vmem:[#allocation2 + $0x1fc] sm:$0xff]
    %v154 = vld [vmem:[#allocation2 + $0x204] sm:$0xf]
    %v155 = vld [vmem:[#allocation2 + $0x208] sm:$0xff]
    %v156 = vld [vmem:[#allocation2 + $0x210] sm:$0xff]
    %v157 = vld [vmem:[#allocation2 + $0x218] sm:$0xf]
    %v158 = vld [vmem:[#allocation2 + $0x21c] sm:$0xff]
    %v159 = vld [vmem:[#allocation2 + $0x224] sm:$0xff]
    %v160 = vld [vmem:[#allocation2 + $0x22c] sm:$0xf]
    %v161 = vld [vmem:[#allocation2 + $0x230] sm:$0xff]
    %v162 = vld [vmem:[#allocation2 + $0x238] sm:$0xff]
    %v163 = vld [vmem:[#allocation2 + $0x240] sm:$0xf]
    %v164 = vld [vmem:[#allocation2 + $0x244] sm:$0xff]
    %v165 = vld [vmem:[#allocation2 + $0x24c] sm:$0xff]
    %v166 = vld [vmem:[#allocation2 + $0x254] sm:$0xf]
    %v167 = vld [vmem:[#allocation2 + $0x258] sm:$0xff]
    %v168 = vld [vmem:[#allocation2 + $0x260] sm:$0xff]
    %v169 = vld [vmem:[#allocation2 + $0x268] sm:$0xf]
    %v170 = vld [vmem:[#allocation2 + $0x26c] sm:$0xff]
    %v171 = vld [vmem:[#allocation2 + $0x274] sm:$0xff]
    %v172 = vld [vmem:[#allocation2 + $0x27c] sm:$0xf]
    %v173 = vld [vmem:[%s2] sm:$0x1f]
    %v175 = vlaneseq
    %v176 = vshrl.u32 %v175, 7
    %v177 = vsub.s32 0, %v176
    %v178 = vrot.slane %v173, %v177
    %v179 = vlaneseq
    %v180 = vshrl.u32 %v179, 7
    %v181 = vsub.s32 1, %v180
    %v182 = vrot.slane %v173, %v181
    %v183 = vlaneseq
    %v184 = vshrl.u32 %v183, 7
    %v185 = vsub.s32 2, %v184
    %v186 = vrot.slane %v173, %v185
    %v187 = vlaneseq
    %v188 = vshrl.u32 %v187, 7
    %v189 = vsub.s32 3, %v188
    %v190 = vrot.slane %v173, %v189
    %v191 = vlaneseq
    %v192 = vshrl.u32 %v191, 7
    %v193 = vsub.s32 4, %v192
    %v194 = vrot.slane %v173, %v193
    %v296 = vunpack.c.l.b16 %v77
    %v297 = vunpack.c.h.b16 %v77
    %v298 = vunpack.c.l.b16 %v78
    %v299 = vunpack.c.h.b16 %v78
    %v300 = vunpack.c.l.b16 %v79
    %v301 = vunpack.c.l.b16 %v80
    %v302 = vunpack.c.h.b16 %v80
    %v303 = vunpack.c.l.b16 %v81
    %v304 = vunpack.c.h.b16 %v81
    %v305 = vunpack.c.l.b16 %v82
    %v306 = vunpack.c.l.b16 %v83
    %v307 = vunpack.c.h.b16 %v83
    %v308 = vunpack.c.l.b16 %v84
    %v309 = vunpack.c.h.b16 %v84
    %v310 = vunpack.c.l.b16 %v85
    %v311 = vunpack.c.l.b16 %v86
    %v312 = vunpack.c.h.b16 %v86
    %v313 = vunpack.c.l.b16 %v87
    %v314 = vunpack.c.h.b16 %v87
    %v315 = vunpack.c.l.b16 %v88
    %v316 = vunpack.c.l.b16 %v89
    %v317 = vunpack.c.h.b16 %v89
    %v318 = vunpack.c.l.b16 %v90
    %v319 = vunpack.c.h.b16 %v90
    %v320 = vunpack.c.l.b16 %v91
    %v321 = vunpack.c.l.b16 %v92
    %v322 = vunpack.c.h.b16 %v92
    %v323 = vunpack.c.l.b16 %v93
    %v324 = vunpack.c.h.b16 %v93
    %v325 = vunpack.c.l.b16 %v94
    %v326 = vunpack.c.l.b16 %v95
    %v327 = vunpack.c.h.b16 %v95
    %v328 = vunpack.c.l.b16 %v96
    %v329 = vunpack.c.h.b16 %v96
    %v330 = vunpack.c.l.b16 %v97
    %v331 = vunpack.c.l.b16 %v98
    %v332 = vunpack.c.h.b16 %v98
    %v333 = vunpack.c.l.b16 %v99
    %v334 = vunpack.c.h.b16 %v99
    %v335 = vunpack.c.l.b16 %v100
    %v336 = vunpack.c.l.b16 %v101
    %v337 = vunpack.c.h.b16 %v101
    %v338 = vunpack.c.l.b16 %v102
    %v339 = vunpack.c.h.b16 %v102
    %v340 = vunpack.c.l.b16 %v103
    %v341 = vunpack.c.l.b16 %v104
    %v342 = vunpack.c.h.b16 %v104
    %v343 = vunpack.c.l.b16 %v105
    %v344 = vunpack.c.h.b16 %v105
    %v345 = vunpack.c.l.b16 %v106
    %v346 = vunpack.c.l.b16 %v107
    %v347 = vunpack.c.h.b16 %v107
    %v348 = vunpack.c.l.b16 %v108
    %v349 = vunpack.c.h.b16 %v108
    %v350 = vunpack.c.l.b16 %v109
    %v351 = vunpack.c.l.b16 %v110
    %v352 = vunpack.c.h.b16 %v110
    %v353 = vunpack.c.l.b16 %v111
    %v354 = vunpack.c.h.b16 %v111
    %v355 = vunpack.c.l.b16 %v112
    %v356 = vunpack.c.l.b16 %v113
    %v357 = vunpack.c.h.b16 %v113
    %v358 = vunpack.c.l.b16 %v114
    %v359 = vunpack.c.h.b16 %v114
    %v360 = vunpack.c.l.b16 %v115
    %v361 = vunpack.c.l.b16 %v116
    %v362 = vunpack.c.h.b16 %v116
    %v363 = vunpack.c.l.b16 %v117
    %v364 = vunpack.c.h.b16 %v117
    %v365 = vunpack.c.l.b16 %v118
    %v366 = vunpack.c.l.b16 %v119
    %v367 = vunpack.c.h.b16 %v119
    %v368 = vunpack.c.l.b16 %v120
    %v369 = vunpack.c.h.b16 %v120
    %v370 = vunpack.c.l.b16 %v121
    %v371 = vunpack.c.l.b16 %v122
    %v372 = vunpack.c.h.b16 %v122
    %v373 = vunpack.c.l.b16 %v123
    %v374 = vunpack.c.h.b16 %v123
    %v375 = vunpack.c.l.b16 %v124
    %v376 = vunpack.c.l.b16 %v125
    %v377 = vunpack.c.h.b16 %v125
    %v378 = vunpack.c.l.b16 %v126
    %v379 = vunpack.c.h.b16 %v126
    %v380 = vunpack.c.l.b16 %v127
    %v381 = vunpack.c.l.b16 %v128
    %v382 = vunpack.c.h.b16 %v128
    %v383 = vunpack.c.l.b16 %v129
    %v384 = vunpack.c.h.b16 %v129
    %v385 = vunpack.c.l.b16 %v130
    %v386 = vunpack.c.l.b16 %v131
    %v387 = vunpack.c.h.b16 %v131
    %v388 = vunpack.c.l.b16 %v132
    %v389 = vunpack.c.h.b16 %v132
    %v390 = vunpack.c.l.b16 %v133
    %v391 = vunpack.c.l.b16 %v134
    %v392 = vunpack.c.h.b16 %v134
    %v393 = vunpack.c.l.b16 %v135
    %v394 = vunpack.c.h.b16 %v135
    %v395 = vunpack.c.l.b16 %v136
    %v396 = vunpack.c.l.b16 %v137
    %v397 = vunpack.c.h.b16 %v137
    %v398 = vunpack.c.l.b16 %v138
    %v399 = vunpack.c.h.b16 %v138
    %v400 = vunpack.c.l.b16 %v139
    %v401 = vunpack.c.l.b16 %v140
    %v402 = vunpack.c.h.b16 %v140
    %v403 = vunpack.c.l.b16 %v141
    %v404 = vunpack.c.h.b16 %v141
    %v405 = vunpack.c.l.b16 %v142
    %v406 = vunpack.c.l.b16 %v143
    %v407 = vunpack.c.h.b16 %v143
    %v408 = vunpack.c.l.b16 %v144
    %v409 = vunpack.c.h.b16 %v144
    %v410 = vunpack.c.l.b16 %v145
    %v411 = vunpack.c.l.b16 %v146
    %v412 = vunpack.c.h.b16 %v146
    %v413 = vunpack.c.l.b16 %v147
    %v414 = vunpack.c.h.b16 %v147
    %v415 = vunpack.c.l.b16 %v148
    %v416 = vunpack.c.l.b16 %v149
    %v417 = vunpack.c.h.b16 %v149
    %v418 = vunpack.c.l.b16 %v150
    %v419 = vunpack.c.h.b16 %v150
    %v420 = vunpack.c.l.b16 %v151
    %v421 = vunpack.c.l.b16 %v152
    %v422 = vunpack.c.h.b16 %v152
    %v423 = vunpack.c.l.b16 %v153
    %v424 = vunpack.c.h.b16 %v153
    %v425 = vunpack.c.l.b16 %v154
    %v426 = vunpack.c.l.b16 %v155
    %v427 = vunpack.c.h.b16 %v155
    %v428 = vunpack.c.l.b16 %v156
    %v429 = vunpack.c.h.b16 %v156
    %v430 = vunpack.c.l.b16 %v157
    %v431 = vunpack.c.l.b16 %v158
    %v432 = vunpack.c.h.b16 %v158
    %v433 = vunpack.c.l.b16 %v159
    %v434 = vunpack.c.h.b16 %v159
    %v435 = vunpack.c.l.b16 %v160
    %v436 = vunpack.c.l.b16 %v161
    %v437 = vunpack.c.h.b16 %v161
    %v438 = vunpack.c.l.b16 %v162
    %v439 = vunpack.c.h.b16 %v162
    %v440 = vunpack.c.l.b16 %v163
    %v441 = vunpack.c.l.b16 %v164
    %v442 = vunpack.c.h.b16 %v164
    %v443 = vunpack.c.l.b16 %v165
    %v444 = vunpack.c.h.b16 %v165
    %v445 = vunpack.c.l.b16 %v166
    %v446 = vunpack.c.l.b16 %v167
    %v447 = vunpack.c.h.b16 %v167
    %v448 = vunpack.c.l.b16 %v168
    %v449 = vunpack.c.h.b16 %v168
    %v450 = vunpack.c.l.b16 %v169
    %v451 = vunpack.c.l.b16 %v170
    %v452 = vunpack.c.h.b16 %v170
    %v453 = vunpack.c.l.b16 %v171
    %v454 = vunpack.c.h.b16 %v171
    %v455 = vunpack.c.l.b16 %v172
    %v456 = vpack.c.b16 %v301, %v296
    %v457 = vpack.c.b16 %v302, %v297
    %v458 = vpack.c.b16 %v303, %v298
    %v459 = vpack.c.b16 %v304, %v299
    %v460 = vpack.c.b16 %v305, %v300
    %v461 = vpack.c.b16 %v311, %v306
    %v462 = vpack.c.b16 %v312, %v307
    %v463 = vpack.c.b16 %v313, %v308
    %v464 = vpack.c.b16 %v314, %v309
    %v465 = vpack.c.b16 %v315, %v310
    %v466 = vpack.c.b16 %v321, %v316
    %v467 = vpack.c.b16 %v322, %v317
    %v468 = vpack.c.b16 %v323, %v318
    %v469 = vpack.c.b16 %v324, %v319
    %v470 = vpack.c.b16 %v325, %v320
    %v471 = vpack.c.b16 %v331, %v326
    %v472 = vpack.c.b16 %v332, %v327
    %v473 = vpack.c.b16 %v333, %v328
    %v474 = vpack.c.b16 %v334, %v329
    %v475 = vpack.c.b16 %v335, %v330
    %v476 = vpack.c.b16 %v341, %v336
    %v477 = vpack.c.b16 %v342, %v337
    %v478 = vpack.c.b16 %v343, %v338
    %v479 = vpack.c.b16 %v344, %v339
    %v480 = vpack.c.b16 %v345, %v340
    %v481 = vpack.c.b16 %v351, %v346
    %v482 = vpack.c.b16 %v352, %v347
    %v483 = vpack.c.b16 %v353, %v348
    %v484 = vpack.c.b16 %v354, %v349
    %v485 = vpack.c.b16 %v355, %v350
    %v486 = vpack.c.b16 %v361, %v356
    %v487 = vpack.c.b16 %v362, %v357
    %v488 = vpack.c.b16 %v363, %v358
    %v489 = vpack.c.b16 %v364, %v359
    %v490 = vpack.c.b16 %v365, %v360
    %v491 = vpack.c.b16 %v371, %v366
    %v492 = vpack.c.b16 %v372, %v367
    %v493 = vpack.c.b16 %v373, %v368
    %v494 = vpack.c.b16 %v374, %v369
    %v495 = vpack.c.b16 %v375, %v370
    %v496 = vpack.c.b16 %v381, %v376
    %v497 = vpack.c.b16 %v382, %v377
    %v498 = vpack.c.b16 %v383, %v378
    %v499 = vpack.c.b16 %v384, %v379
    %v500 = vpack.c.b16 %v385, %v380
    %v501 = vpack.c.b16 %v391, %v386
    %v502 = vpack.c.b16 %v392, %v387
    %v503 = vpack.c.b16 %v393, %v388
    %v504 = vpack.c.b16 %v394, %v389
    %v505 = vpack.c.b16 %v395, %v390
    %v506 = vpack.c.b16 %v401, %v396
    %v507 = vpack.c.b16 %v402, %v397
    %v508 = vpack.c.b16 %v403, %v398
    %v509 = vpack.c.b16 %v404, %v399
    %v510 = vpack.c.b16 %v405, %v400
    %v511 = vpack.c.b16 %v411, %v406
    %v512 = vpack.c.b16 %v412, %v407
    %v513 = vpack.c.b16 %v413, %v408
    %v514 = vpack.c.b16 %v414, %v409
    %v515 = vpack.c.b16 %v415, %v410
    %v516 = vpack.c.b16 %v421, %v416
    %v517 = vpack.c.b16 %v422, %v417
    %v518 = vpack.c.b16 %v423, %v418
    %v519 = vpack.c.b16 %v424, %v419
    %v520 = vpack.c.b16 %v425, %v420
    %v521 = vpack.c.b16 %v431, %v426
    %v522 = vpack.c.b16 %v432, %v427
    %v523 = vpack.c.b16 %v433, %v428
    %v524 = vpack.c.b16 %v434, %v429
    %v525 = vpack.c.b16 %v435, %v430
    %v526 = vpack.c.b16 %v441, %v436
    %v527 = vpack.c.b16 %v442, %v437
    %v528 = vpack.c.b16 %v443, %v438
    %v529 = vpack.c.b16 %v444, %v439
    %v530 = vpack.c.b16 %v445, %v440
    %v531 = vpack.c.b16 %v451, %v446
    %v532 = vpack.c.b16 %v452, %v447
    %v533 = vpack.c.b16 %v453, %v448
    %v534 = vpack.c.b16 %v454, %v449
    %v535 = vpack.c.b16 %v455, %v450
    %616 = vmatprep.subr.bf16.mxu0 %v457
    %617 = vmatpush1.bf16.msra.mxu0 %v456
    %618 = vmatprep.subr.bf16.mxu0 %v462
    %619 = vmatpush1.bf16.msra.mxu0 %v461
    %620 = vmatprep.subr.bf16.mxu0 %v467
    %621 = vmatpush1.bf16.msra.mxu0 %v466
    %622 = vmatprep.subr.bf16.mxu0 %v472
    %623 = vmatpush1.bf16.msra.mxu0 %v471
    %624 = vmatprep.subr.bf16.mxu0 %v477
    %625 = vmatpush1.bf16.msra.mxu0 %v476
    %626 = vmatprep.subr.bf16.mxu0 %v482
    %627 = vmatpush1.bf16.msra.mxu0 %v481
    %628 = vmatprep.subr.bf16.mxu0 %v487
    %629 = vmatpush1.bf16.msra.mxu0 %v486
    %630 = vmatprep.subr.bf16.mxu0 %v492
    %631 = vmatpush1.bf16.msra.mxu0 %v491
    %632 = vmatprep.subr.bf16.mxu0 %v497
    %633 = vmatpush1.bf16.msra.mxu0 %v496
    %634 = vmatprep.subr.bf16.mxu0 %v502
    %635 = vmatpush1.bf16.msra.mxu0 %v501
    %636 = vmatprep.subr.bf16.mxu0 %v507
    %637 = vmatpush1.bf16.msra.mxu0 %v506
    %638 = vmatprep.subr.bf16.mxu0 %v512
    %639 = vmatpush1.bf16.msra.mxu0 %v511
    %640 = vmatprep.subr.bf16.mxu0 %v517
    %641 = vmatpush1.bf16.msra.mxu0 %v516
    %642 = vmatprep.subr.bf16.mxu0 %v522
    %643 = vmatpush1.bf16.msra.mxu0 %v521
    %644 = vmatprep.subr.bf16.mxu0 %v527
    %645 = vmatpush1.bf16.msra.mxu0 %v526
    %646 = vmatprep.subr.bf16.mxu0 %v532
    %647 = vmatpush1.bf16.msra.mxu0 %v531
    %648 = vmatprep.mubr.bf16.mxu0 %v76
    %649 = vmatmul.mubr.bf16.gmra.mrb[0].mxu0 %v75
    %v650 = vpop.f32.mrb[0].mxu0
    %v651 = vadd.f32 %v178, %v650
    %v652 = vpop.f32.mrb[0].mxu0
    %v653 = vadd.f32 %v182, %v652
    %v654 = vpop.f32.mrb[0].mxu0
    %v655 = vpop.f32.mrb[0].mxu0
    %656 = vdwg.mxu0
    %657 = vmatprep.subr.bf16.mxu0 %v459
    %658 = vmatpush1.bf16.msra.mxu0 %v458
    %659 = vmatprep.subr.bf16.mxu0 %v464
    %660 = vmatpush1.bf16.msra.mxu0 %v463
    %661 = vmatprep.subr.bf16.mxu0 %v469
    %662 = vmatpush1.bf16.msra.mxu0 %v468
    %663 = vmatprep.subr.bf16.mxu0 %v474
    %664 = vmatpush1.bf16.msra.mxu0 %v473
    %665 = vmatprep.subr.bf16.mxu0 %v479
    %666 = vmatpush1.bf16.msra.mxu0 %v478
    %667 = vmatprep.subr.bf16.mxu0 %v484
    %668 = vmatpush1.bf16.msra.mxu0 %v483
    %669 = vmatprep.subr.bf16.mxu0 %v489
    %670 = vmatpush1.bf16.msra.mxu0 %v488
    %671 = vmatprep.subr.bf16.mxu0 %v494
    %672 = vmatpush1.bf16.msra.mxu0 %v493
    %673 = vmatprep.subr.bf16.mxu0 %v499
    %674 = vmatpush1.bf16.msra.mxu0 %v498
    %675 = vmatprep.subr.bf16.mxu0 %v504
    %676 = vmatpush1.bf16.msra.mxu0 %v503
    %677 = vmatprep.subr.bf16.mxu0 %v509
    %678 = vmatpush1.bf16.msra.mxu0 %v508
    %679 = vmatprep.subr.bf16.mxu0 %v514
    %680 = vmatpush1.bf16.msra.mxu0 %v513
    %681 = vmatprep.subr.bf16.mxu0 %v519
    %682 = vmatpush1.bf16.msra.mxu0 %v518
    %683 = vmatprep.subr.bf16.mxu0 %v524
    %684 = vmatpush1.bf16.msra.mxu0 %v523
    %685 = vmatprep.subr.bf16.mxu0 %v529
    %686 = vmatpush1.bf16.msra.mxu0 %v528
    %687 = vmatprep.subr.bf16.mxu0 %v534
    %688 = vmatpush1.bf16.msra.mxu0 %v533
    %689 = vmatprep.mubr.bf16.mxu0 %v76
    %690 = vmatmul.mubr.bf16.gmra.mrb[0].mxu0 %v75
    %v691 = vpop.f32.mrb[0].mxu0
    %v692 = vadd.f32 %v186, %v691
    %v693 = vpop.f32.mrb[0].mxu0
    %v694 = vadd.f32 %v190, %v693
    %v695 = vpop.f32.mrb[0].mxu0
    %v696 = vpop.f32.mrb[0].mxu0
    %697 = vdwg.mxu0
    %698 = vmatprep.subr.bf16.mxu0 0
    %699 = vmatpush1.bf16.msra.mxu0 %v460
    %700 = vmatprep.subr.bf16.mxu0 0
    %701 = vmatpush1.bf16.msra.mxu0 %v465
    %702 = vmatprep.subr.bf16.mxu0 0
    %703 = vmatpush1.bf16.msra.mxu0 %v470
    %704 = vmatprep.subr.bf16.mxu0 0
    %705 = vmatpush1.bf16.msra.mxu0 %v475
    %706 = vmatprep.subr.bf16.mxu0 0
    %707 = vmatpush1.bf16.msra.mxu0 %v480
    %708 = vmatprep.subr.bf16.mxu0 0
    %709 = vmatpush1.bf16.msra.mxu0 %v485
    %710 = vmatprep.subr.bf16.mxu0 0
    %711 = vmatpush1.bf16.msra.mxu0 %v490
    %712 = vmatprep.subr.bf16.mxu0 0
    %713 = vmatpush1.bf16.msra.mxu0 %v495
    %714 = vmatprep.subr.bf16.mxu0 0
    %715 = vmatpush1.bf16.msra.mxu0 %v500
    %716 = vmatprep.subr.bf16.mxu0 0
    %717 = vmatpush1.bf16.msra.mxu0 %v505
    %718 = vmatprep.subr.bf16.mxu0 0
    %719 = vmatpush1.bf16.msra.mxu0 %v510
    %720 = vmatprep.subr.bf16.mxu0 0
    %721 = vmatpush1.bf16.msra.mxu0 %v515
    %722 = vmatprep.subr.bf16.mxu0 0
    %723 = vmatpush1.bf16.msra.mxu0 %v520
    %724 = vmatprep.subr.bf16.mxu0 0
    %725 = vmatpush1.bf16.msra.mxu0 %v525
    %726 = vmatprep.subr.bf16.mxu0 0
    %727 = vmatpush1.bf16.msra.mxu0 %v530
    %728 = vmatprep.subr.bf16.mxu0 0
    %729 = vmatpush1.bf16.msra.mxu0 %v535
    %730 = vmatprep.mubr.bf16.mxu0 %v76
    %731 = vmatmul.mubr.bf16.gmra.mrb[0].mxu0 %v75
    %v732 = vpop.f32.mrb[0].mxu0
    %v733 = vadd.f32 %v194, %v732
    %v734 = vpop.f32.mrb[0].mxu0
    %v735 = vpop.f32.mrb[0].mxu0
    %v736 = vpop.f32.mrb[0].mxu0
    %737 = vdwg.mxu0
    %739 = vrot.lane.b32.xlu0 %v651, 64
    %v740 = vpop.permute.xlu0 %739
    %vm742 = vcmask 523264
    %v743 = vsel %vm742, %v651, %v740
    %v744 = vsel %vm742, %v740, %v651
    %v745 = vmul.f32 %v743, %v653
    %v746 = vmul.f32 %v743, %v692
    %v747 = vmul.f32 %v744, %v653
    %v748 = vmul.f32 %v744, %v692
    %v749 = vpack.c.bf16 %v745, %v745
    %v750 = vpack.c.bf16 %v746, %v746
    %v751 = vpack.c.bf16 %v747, %v747
    %v752 = vpack.c.bf16 %v748, %v748
    %v753 = vld [vmem:[%s3] sm:$0xf]
    %v754 = vld [vmem:[%s3 + $0x4] sm:$0xf]
    %v755 = vld [vmem:[%s3 + $0x8] sm:$0xf]
    %v756 = vld [vmem:[%s3 + $0xc] sm:$0xf]
    %v757 = vld [vmem:[%s3 + $0x10] sm:$0xf]
    %v758 = vld [vmem:[%s3 + $0x14] sm:$0xf]
    %v759 = vld [vmem:[%s3 + $0x18] sm:$0xf]
    %v760 = vld [vmem:[%s3 + $0x1c] sm:$0xf]
    %v761 = vld [vmem:[%s3 + $0x20] sm:$0xf]
    %v762 = vld [vmem:[%s3 + $0x24] sm:$0xf]
    %v763 = vld [vmem:[%s3 + $0x28] sm:$0xf]
    %v764 = vld [vmem:[%s3 + $0x2c] sm:$0xf]
    %v765 = vld [vmem:[%s3 + $0x30] sm:$0xf]
    %v766 = vld [vmem:[%s3 + $0x34] sm:$0xf]
    %v767 = vld [vmem:[%s3 + $0x38] sm:$0xf]
    %v768 = vld [vmem:[%s3 + $0x3c] sm:$0xf]
    %v769 = vld [vmem:[%s3 + $0x40] sm:$0xf]
    %v770 = vld [vmem:[%s3 + $0x44] sm:$0xf]
    %v771 = vld [vmem:[%s3 + $0x48] sm:$0xf]
    %v772 = vld [vmem:[%s3 + $0x4c] sm:$0xf]
    %v773 = vld [vmem:[%s3 + $0x50] sm:$0xf]
    %v774 = vld [vmem:[%s3 + $0x54] sm:$0xf]
    %v775 = vld [vmem:[%s3 + $0x58] sm:$0xf]
    %v776 = vld [vmem:[%s3 + $0x5c] sm:$0xf]
    %v777 = vld [vmem:[%s3 + $0x60] sm:$0xf]
    %v778 = vld [vmem:[%s3 + $0x64] sm:$0xf]
    %v779 = vld [vmem:[%s3 + $0x68] sm:$0xf]
    %v780 = vld [vmem:[%s3 + $0x6c] sm:$0xf]
    %v781 = vld [vmem:[%s3 + $0x70] sm:$0xf]
    %v782 = vld [vmem:[%s3 + $0x74] sm:$0xf]
    %v783 = vld [vmem:[%s3 + $0x78] sm:$0xf]
    %v784 = vld [vmem:[%s3 + $0x7c] sm:$0xf]
    %v785 = vld [vmem:[%s3 + $0x80] sm:$0xf]
    %v786 = vld [vmem:[%s3 + $0x84] sm:$0xf]
    %v787 = vld [vmem:[%s3 + $0x88] sm:$0xf]
    %v788 = vld [vmem:[%s3 + $0x8c] sm:$0xf]
    %v789 = vld [vmem:[%s3 + $0x90] sm:$0xf]
    %v790 = vld [vmem:[%s3 + $0x94] sm:$0xf]
    %v791 = vld [vmem:[%s3 + $0x98] sm:$0xf]
    %v792 = vld [vmem:[%s3 + $0x9c] sm:$0xf]
    %v793 = vld [vmem:[%s3 + $0xa0] sm:$0xf]
    %v794 = vld [vmem:[%s3 + $0xa4] sm:$0xf]
    %v795 = vld [vmem:[%s3 + $0xa8] sm:$0xf]
    %v796 = vld [vmem:[%s3 + $0xac] sm:$0xf]
    %v797 = vld [vmem:[%s3 + $0xb0] sm:$0xf]
    %v798 = vld [vmem:[%s3 + $0xb4] sm:$0xf]
    %v799 = vld [vmem:[%s3 + $0xb8] sm:$0xf]
    %v800 = vld [vmem:[%s3 + $0xbc] sm:$0xf]
    %v801 = vld [vmem:[%s3 + $0xc0] sm:$0xf]
    %v802 = vld [vmem:[%s3 + $0xc4] sm:$0xf]
    %v803 = vld [vmem:[%s3 + $0xc8] sm:$0xf]
    %v804 = vld [vmem:[%s3 + $0xcc] sm:$0xf]
    %v805 = vld [vmem:[%s3 + $0xd0] sm:$0xf]
    %v806 = vld [vmem:[%s3 + $0xd4] sm:$0xf]
    %v807 = vld [vmem:[%s3 + $0xd8] sm:$0xf]
    %v808 = vld [vmem:[%s3 + $0xdc] sm:$0xf]
    %v809 = vld [vmem:[%s3 + $0xe0] sm:$0xf]
    %v810 = vld [vmem:[%s3 + $0xe4] sm:$0xf]
    %v811 = vld [vmem:[%s3 + $0xe8] sm:$0xf]
    %v812 = vld [vmem:[%s3 + $0xec] sm:$0xf]
    %v813 = vld [vmem:[%s3 + $0xf0] sm:$0xf]
    %v814 = vld [vmem:[%s3 + $0xf4] sm:$0xf]
    %v815 = vld [vmem:[%s3 + $0xf8] sm:$0xf]
    %v816 = vld [vmem:[%s3 + $0xfc] sm:$0xf]
    %v881 = vunpack.c.l.b16 %v753
    %v882 = vunpack.c.l.b16 %v754
    %v883 = vunpack.c.l.b16 %v755
    %v884 = vunpack.c.l.b16 %v756
    %v885 = vunpack.c.l.b16 %v757
    %v886 = vunpack.c.l.b16 %v758
    %v887 = vunpack.c.l.b16 %v759
    %v888 = vunpack.c.l.b16 %v760
    %v889 = vunpack.c.l.b16 %v761
    %v890 = vunpack.c.l.b16 %v762
    %v891 = vunpack.c.l.b16 %v763
    %v892 = vunpack.c.l.b16 %v764
    %v893 = vunpack.c.l.b16 %v765
    %v894 = vunpack.c.l.b16 %v766
    %v895 = vunpack.c.l.b16 %v767
    %v896 = vunpack.c.l.b16 %v768
    %v897 = vunpack.c.l.b16 %v769
    %v898 = vunpack.c.l.b16 %v770
    %v899 = vunpack.c.l.b16 %v771
    %v900 = vunpack.c.l.b16 %v772
    %v901 = vunpack.c.l.b16 %v773
    %v902 = vunpack.c.l.b16 %v774
    %v903 = vunpack.c.l.b16 %v775
    %v904 = vunpack.c.l.b16 %v776
    %v905 = vunpack.c.l.b16 %v777
    %v906 = vunpack.c.l.b16 %v778
    %v907 = vunpack.c.l.b16 %v779
    %v908 = vunpack.c.l.b16 %v780
    %v909 = vunpack.c.l.b16 %v781
    %v910 = vunpack.c.l.b16 %v782
    %v911 = vunpack.c.l.b16 %v783
    %v912 = vunpack.c.l.b16 %v784
    %v913 = vunpack.c.l.b16 %v785
    %v914 = vunpack.c.l.b16 %v786
    %v915 = vunpack.c.l.b16 %v787
    %v916 = vunpack.c.l.b16 %v788
    %v917 = vunpack.c.l.b16 %v789
    %v918 = vunpack.c.l.b16 %v790
    %v919 = vunpack.c.l.b16 %v791
    %v920 = vunpack.c.l.b16 %v792
    %v921 = vunpack.c.l.b16 %v793
    %v922 = vunpack.c.l.b16 %v794
    %v923 = vunpack.c.l.b16 %v795
    %v924 = vunpack.c.l.b16 %v796
    %v925 = vunpack.c.l.b16 %v797
    %v926 = vunpack.c.l.b16 %v798
    %v927 = vunpack.c.l.b16 %v799
    %v928 = vunpack.c.l.b16 %v800
    %v929 = vunpack.c.l.b16 %v801
    %v930 = vunpack.c.l.b16 %v802
    %v931 = vunpack.c.l.b16 %v803
    %v932 = vunpack.c.l.b16 %v804
    %v933 = vunpack.c.l.b16 %v805
    %v934 = vunpack.c.l.b16 %v806
    %v935 = vunpack.c.l.b16 %v807
    %v936 = vunpack.c.l.b16 %v808
    %v937 = vunpack.c.l.b16 %v809
    %v938 = vunpack.c.l.b16 %v810
    %v939 = vunpack.c.l.b16 %v811
    %v940 = vunpack.c.l.b16 %v812
    %v941 = vunpack.c.l.b16 %v813
    %v942 = vunpack.c.l.b16 %v814
    %v943 = vunpack.c.l.b16 %v815
    %v944 = vunpack.c.l.b16 %v816
    %v945 = vpack.c.b16 %v882, %v881
    %v946 = vpack.c.b16 %v884, %v883
    %v947 = vpack.c.b16 %v886, %v885
    %v948 = vpack.c.b16 %v888, %v887
    %v949 = vpack.c.b16 %v890, %v889
    %v950 = vpack.c.b16 %v892, %v891
    %v951 = vpack.c.b16 %v894, %v893
    %v952 = vpack.c.b16 %v896, %v895
    %v953 = vpack.c.b16 %v898, %v897
    %v954 = vpack.c.b16 %v900, %v899
    %v955 = vpack.c.b16 %v902, %v901
    %v956 = vpack.c.b16 %v904, %v903
    %v957 = vpack.c.b16 %v906, %v905
    %v958 = vpack.c.b16 %v908, %v907
    %v959 = vpack.c.b16 %v910, %v909
    %v960 = vpack.c.b16 %v912, %v911
    %v961 = vpack.c.b16 %v914, %v913
    %v962 = vpack.c.b16 %v916, %v915
    %v963 = vpack.c.b16 %v918, %v917
    %v964 = vpack.c.b16 %v920, %v919
    %v965 = vpack.c.b16 %v922, %v921
    %v966 = vpack.c.b16 %v924, %v923
    %v967 = vpack.c.b16 %v926, %v925
    %v968 = vpack.c.b16 %v928, %v927
    %v969 = vpack.c.b16 %v930, %v929
    %v970 = vpack.c.b16 %v932, %v931
    %v971 = vpack.c.b16 %v934, %v933
    %v972 = vpack.c.b16 %v936, %v935
    %v973 = vpack.c.b16 %v938, %v937
    %v974 = vpack.c.b16 %v940, %v939
    %v975 = vpack.c.b16 %v942, %v941
    %v976 = vpack.c.b16 %v944, %v943
    %1009 = vmatprep.subr.bf16.mxu0 0
    %1010 = vmatpush1.bf16.msra.mxu0 %v945
    %1011 = vmatprep.subr.bf16.mxu0 0
    %1012 = vmatpush1.bf16.msra.mxu0 %v946
    %1013 = vmatprep.subr.bf16.mxu0 0
    %1014 = vmatpush1.bf16.msra.mxu0 %v947
    %1015 = vmatprep.subr.bf16.mxu0 0
    %1016 = vmatpush1.bf16.msra.mxu0 %v948
    %1017 = vmatprep.subr.bf16.mxu0 0
    %1018 = vmatpush1.bf16.msra.mxu0 %v949
    %1019 = vmatprep.subr.bf16.mxu0 0
    %1020 = vmatpush1.bf16.msra.mxu0 %v950
    %1021 = vmatprep.subr.bf16.mxu0 0
    %1022 = vmatpush1.bf16.msra.mxu0 %v951
    %1023 = vmatprep.subr.bf16.mxu0 0
    %1024 = vmatpush1.bf16.msra.mxu0 %v952
    %1025 = vmatprep.subr.bf16.mxu0 0
    %1026 = vmatpush1.bf16.msra.mxu0 %v953
    %1027 = vmatprep.subr.bf16.mxu0 0
    %1028 = vmatpush1.bf16.msra.mxu0 %v954
    %1029 = vmatprep.subr.bf16.mxu0 0
    %1030 = vmatpush1.bf16.msra.mxu0 %v955
    %1031 = vmatprep.subr.bf16.mxu0 0
    %1032 = vmatpush1.bf16.msra.mxu0 %v956
    %1033 = vmatprep.subr.bf16.mxu0 0
    %1034 = vmatpush1.bf16.msra.mxu0 %v957
    %1035 = vmatprep.subr.bf16.mxu0 0
    %1036 = vmatpush1.bf16.msra.mxu0 %v958
    %1037 = vmatprep.subr.bf16.mxu0 0
    %1038 = vmatpush1.bf16.msra.mxu0 %v959
    %1039 = vmatprep.subr.bf16.mxu0 0
    %1040 = vmatpush1.bf16.msra.mxu0 %v960
    %1041 = vmatprep.mubr.bf16.mxu0 %v750
    %1042 = vmatmul.mubr.bf16.gmra.mrb[0].mxu0 %v749
    %v1043 = vpop.f32.mrb[0].mxu0
    %v1044 = vadd.f32 0.0, %v1043
    %v1045 = vpop.f32.mrb[0].mxu0
    %v1046 = vpop.f32.mrb[0].mxu0
    %v1047 = vpop.f32.mrb[0].mxu0
    %1048 = vdwg.mxu0
    %1049 = vmatprep.subr.bf16.mxu0 0
    %1050 = vmatpush1.bf16.msra.mxu0 %v961
    %1051 = vmatprep.subr.bf16.mxu0 0
    %1052 = vmatpush1.bf16.msra.mxu0 %v962
    %1053 = vmatprep.subr.bf16.mxu0 0
    %1054 = vmatpush1.bf16.msra.mxu0 %v963
    %1055 = vmatprep.subr.bf16.mxu0 0
    %1056 = vmatpush1.bf16.msra.mxu0 %v964
    %1057 = vmatprep.subr.bf16.mxu0 0
    %1058 = vmatpush1.bf16.msra.mxu0 %v965
    %1059 = vmatprep.subr.bf16.mxu0 0
    %1060 = vmatpush1.bf16.msra.mxu0 %v966
    %1061 = vmatprep.subr.bf16.mxu0 0
    %1062 = vmatpush1.bf16.msra.mxu0 %v967
    %1063 = vmatprep.subr.bf16.mxu0 0
    %1064 = vmatpush1.bf16.msra.mxu0 %v968
    %1065 = vmatprep.subr.bf16.mxu0 0
    %1066 = vmatpush1.bf16.msra.mxu0 %v969
    %1067 = vmatprep.subr.bf16.mxu0 0
    %1068 = vmatpush1.bf16.msra.mxu0 %v970
    %1069 = vmatprep.subr.bf16.mxu0 0
    %1070 = vmatpush1.bf16.msra.mxu0 %v971
    %1071 = vmatprep.subr.bf16.mxu0 0
    %1072 = vmatpush1.bf16.msra.mxu0 %v972
    %1073 = vmatprep.subr.bf16.mxu0 0
    %1074 = vmatpush1.bf16.msra.mxu0 %v973
    %1075 = vmatprep.subr.bf16.mxu0 0
    %1076 = vmatpush1.bf16.msra.mxu0 %v974
    %1077 = vmatprep.subr.bf16.mxu0 0
    %1078 = vmatpush1.bf16.msra.mxu0 %v975
    %1079 = vmatprep.subr.bf16.mxu0 0
    %1080 = vmatpush1.bf16.msra.mxu0 %v976
    %1081 = vmatprep.mubr.bf16.mxu0 %v752
    %1082 = vmatmul.mubr.bf16.gmra.mrb[0].mxu0 %v751
    %v1083 = vpop.f32.mrb[0].mxu0
    %v1084 = vadd.f32 %v1044, %v1083
    %v1085 = vpop.f32.mrb[0].mxu0
    %v1086 = vpop.f32.mrb[0].mxu0
    %v1087 = vpop.f32.mrb[0].mxu0
    %1088 = vdwg.mxu0
    %1090 = vrot.lane.b32.xlu0 %v1084, 120
    %v1091 = vpop.permute.xlu0 %1090
    %v1093 = vmax.f32 %v1084, %v1091
    %1095 = vrot.lane.b32.xlu0 %v1093, 112
    %v1096 = vpop.permute.xlu0 %1095
    %v1098 = vmax.f32 %v1093, %v1096
    %v1099 = vsub.f32 %v1084, %v1098
    %v1100 = vmul.f32 %v1099, 1.442695
    %v1101 = vpow.pop %v1100
    %1103 = vrot.lane.b32.xlu0 %v1098, 8
    %v1104 = vpop.permute.xlu0 %1103
    %v1106 = vsub.f32 %v1084, %v1104
    %v1107 = vmul.f32 %v1106, 1.442695
    %v1108 = vpow.pop %v1107
    %1109 = vrot.lane.b32.xlu0 %v1098, 16
    %v1110 = vpop.permute.xlu0 %1109
    %v1112 = vsub.f32 %v1084, %v1110
    %v1113 = vmul.f32 %v1112, 1.442695
    %v1114 = vpow.pop %v1113
    %1115 = vrot.lane.b32.xlu0 %v1098, 24
    %v1116 = vpop.permute.xlu0 %1115
    %v1118 = vsub.f32 %v1084, %v1116
    %v1119 = vmul.f32 %v1118, 1.442695
    %v1120 = vpow.pop %v1119
    %1122 = vrot.lane.b32.xlu0 %v1108, 120
    %v1123 = vpop.permute.xlu0 %1122
    %v1125 = vadd.f32 %v1101, %v1123
    %1127 = vrot.lane.b32.xlu0 %v1114, 112
    %v1128 = vpop.permute.xlu0 %1127
    %v1130 = vadd.f32 %v1125, %v1128
    %1132 = vrot.lane.b32.xlu0 %v1120, 104
    %v1133 = vpop.permute.xlu0 %1132
    %v1135 = vadd.f32 %v1130, %v1133
    %v1136 = vrcp.pop %v1135
    %v1137 = vmul.f32 1.0, %v1136
    %v1138 = vmul.f32 %v1101, %v1137
    %1140 = vrot.lane.b32.xlu0 %v1137, 8
    %v1141 = vpop.permute.xlu0 %1140
    %v1143 = vmul.f32 %v1108, %v1141
    %1144 = vrot.lane.b32.xlu0 %v1137, 16
    %v1145 = vpop.permute.xlu0 %1144
    %v1147 = vmul.f32 %v1114, %v1145
    %1148 = vrot.lane.b32.xlu0 %v1137, 24
    %v1149 = vpop.permute.xlu0 %1148
    %v1151 = vmul.f32 %v1120, %v1149
    %vm1152 = vcmask 64512
    %v1153 = vsel %vm1152, %v1138, %v1143
    %vm1154 = vcmask 130048
    %v1155 = vsel %vm1154, %v1153, %v1147
    %vm1156 = vcmask 195584
    %v1157 = vsel %vm1156, %v1155, %v1151
    %v1158 = vpack.c.bf16 %v1157, %v1157
    %v1159 = vld [vmem:[#allocation5] sm:$0xff]
    %v1160 = vld [vmem:[#allocation5 + $0x8] sm:$0xff]
    %v1161 = vld [vmem:[#allocation5 + $0x10] sm:$0xff]
    %v1162 = vld [vmem:[#allocation5 + $0x18] sm:$0xff]
    %v1163 = vld [vmem:[#allocation5 + $0x20] sm:$0xff]
    %v1164 = vld [vmem:[#allocation5 + $0x28] sm:$0xff]
    %v1165 = vld [vmem:[#allocation5 + $0x30] sm:$0xff]
    %v1166 = vld [vmem:[#allocation5 + $0x38] sm:$0xff]
    %v1175 = vunpack.c.l.b16 %v1159
    %v1176 = vunpack.c.h.b16 %v1159
    %v1177 = vunpack.c.l.b16 %v1160
    %v1178 = vunpack.c.h.b16 %v1160
    %v1179 = vunpack.c.l.b16 %v1161
    %v1180 = vunpack.c.h.b16 %v1161
    %v1181 = vunpack.c.l.b16 %v1162
    %v1182 = vunpack.c.h.b16 %v1162
    %v1183 = vunpack.c.l.b16 %v1163
    %v1184 = vunpack.c.h.b16 %v1163
    %v1185 = vunpack.c.l.b16 %v1164
    %v1186 = vunpack.c.h.b16 %v1164
    %v1187 = vunpack.c.l.b16 %v1165
    %v1188 = vunpack.c.h.b16 %v1165
    %v1189 = vunpack.c.l.b16 %v1166
    %v1190 = vunpack.c.h.b16 %v1166
    %v1191 = vpack.c.b16 %v1179, %v1175
    %v1192 = vpack.c.b16 %v1180, %v1176
    %v1193 = vpack.c.b16 %v1181, %v1177
    %v1194 = vpack.c.b16 %v1182, %v1178
    %v1195 = vpack.c.b16 %v1187, %v1183
    %v1196 = vpack.c.b16 %v1188, %v1184
    %v1197 = vpack.c.b16 %v1189, %v1185
    %v1198 = vpack.c.b16 %v1190, %v1186
    %vm1207 = vcmask 261120
    %v1209 = vsel %vm1207, %v1158, 0
    %1211 = vmatprep.subr.bf16.mxu0 %v1192
    %1212 = vmatpush1.bf16.msra.mxu0 %v1191
    %1213 = vmatprep.subr.bf16.mxu0 %v1196
    %1214 = vmatpush1.bf16.msra.mxu0 %v1195
    %1215 = vmatprep.subr.bf16.mxu0 0
    %1216 = vmatpush1.bf16.msra.mxu0 0
    %1217 = vmatprep.subr.bf16.mxu0 0
    %1218 = vmatpush1.bf16.msra.mxu0 0
    %1219 = vmatprep.subr.bf16.mxu0 0
    %1220 = vmatpush1.bf16.msra.mxu0 0
    %1221 = vmatprep.subr.bf16.mxu0 0
    %1222 = vmatpush1.bf16.msra.mxu0 0
    %1223 = vmatprep.subr.bf16.mxu0 0
    %1224 = vmatpush1.bf16.msra.mxu0 0
    %1225 = vmatprep.subr.bf16.mxu0 0
    %1226 = vmatpush1.bf16.msra.mxu0 0
    %1227 = vmatprep.subr.bf16.mxu0 0
    %1228 = vmatpush1.bf16.msra.mxu0 0
    %1229 = vmatprep.subr.bf16.mxu0 0
    %1230 = vmatpush1.bf16.msra.mxu0 0
    %1231 = vmatprep.subr.bf16.mxu0 0
    %1232 = vmatpush1.bf16.msra.mxu0 0
    %1233 = vmatprep.subr.bf16.mxu0 0
    %1234 = vmatpush1.bf16.msra.mxu0 0
    %1235 = vmatprep.subr.bf16.mxu0 0
    %1236 = vmatpush1.bf16.msra.mxu0 0
    %1237 = vmatprep.subr.bf16.mxu0 0
    %1238 = vmatpush1.bf16.msra.mxu0 0
    %1239 = vmatprep.subr.bf16.mxu0 0
    %1240 = vmatpush1.bf16.msra.mxu0 0
    %1241 = vmatprep.subr.bf16.mxu0 0
    %1242 = vmatpush1.bf16.msra.mxu0 0
    %1243 = vmatprep.mubr.bf16.mxu0 0
    %1244 = vmatmul.mubr.bf16.gmra.mrb[0].mxu0 %v1209
    %v1245 = vpop.f32.mrb[0].mxu0
    %v1246 = vadd.f32 0.0, %v1245
    %v1247 = vpop.f32.mrb[0].mxu0
    %v1248 = vadd.f32 0.0, %v1247
    %v1249 = vpop.f32.mrb[0].mxu0
    %v1250 = vpop.f32.mrb[0].mxu0
    %1251 = vdwg.mxu0
    %1252 = vmatprep.subr.bf16.mxu0 %v1194
    %1253 = vmatpush1.bf16.msra.mxu0 %v1193
    %1254 = vmatprep.subr.bf16.mxu0 %v1198
    %1255 = vmatpush1.bf16.msra.mxu0 %v1197
    %1256 = vmatprep.subr.bf16.mxu0 0
    %1257 = vmatpush1.bf16.msra.mxu0 0
    %1258 = vmatprep.subr.bf16.mxu0 0
    %1259 = vmatpush1.bf16.msra.mxu0 0
    %1260 = vmatprep.subr.bf16.mxu0 0
    %1261 = vmatpush1.bf16.msra.mxu0 0
    %1262 = vmatprep.subr.bf16.mxu0 0
    %1263 = vmatpush1.bf16.msra.mxu0 0
    %1264 = vmatprep.subr.bf16.mxu0 0
    %1265 = vmatpush1.bf16.msra.mxu0 0
    %1266 = vmatprep.subr.bf16.mxu0 0
    %1267 = vmatpush1.bf16.msra.mxu0 0
    %1268 = vmatprep.subr.bf16.mxu0 0
    %1269 = vmatpush1.bf16.msra.mxu0 0
    %1270 = vmatprep.subr.bf16.mxu0 0
    %1271 = vmatpush1.bf16.msra.mxu0 0
    %1272 = vmatprep.subr.bf16.mxu0 0
    %1273 = vmatpush1.bf16.msra.mxu0 0
    %1274 = vmatprep.subr.bf16.mxu0 0
    %1275 = vmatpush1.bf16.msra.mxu0 0
    %1276 = vmatprep.subr.bf16.mxu0 0
    %1277 = vmatpush1.bf16.msra.mxu0 0
    %1278 = vmatprep.subr.bf16.mxu0 0
    %1279 = vmatpush1.bf16.msra.mxu0 0
    %1280 = vmatprep.subr.bf16.mxu0 0
    %1281 = vmatpush1.bf16.msra.mxu0 0
    %1282 = vmatprep.subr.bf16.mxu0 0
    %1283 = vmatpush1.bf16.msra.mxu0 0
    %1284 = vmatprep.mubr.bf16.mxu0 0
    %1285 = vmatmul.mubr.bf16.gmra.mrb[0].mxu0 %v1209
    %v1286 = vpop.f32.mrb[0].mxu0
    %v1287 = vadd.f32 0.0, %v1286
    %v1288 = vpop.f32.mrb[0].mxu0
    %v1289 = vadd.f32 0.0, %v1288
    %v1290 = vpop.f32.mrb[0].mxu0
    %v1291 = vpop.f32.mrb[0].mxu0
    %1292 = vdwg.mxu0
    %v1293 = vmul.f32 %v1246, %v694
    %v1294 = vmul.f32 %v1248, %v733
    %v1295 = vmul.f32 %v1287, %v694
    %v1296 = vmul.f32 %v1289, %v733
    %v1297 = vpack.c.bf16 %v1293, %v1293
    %v1298 = vpack.c.bf16 %v1294, %v1294
    %v1299 = vpack.c.bf16 %v1295, %v1295
    %v1300 = vpack.c.bf16 %v1296, %v1296
    %v1301 = vld [vmem:[%s5] sm:$0xf]
    %v1302 = vld [vmem:[%s5 + $0x4] sm:$0xf]
    %v1303 = vld [vmem:[%s5 + $0x8] sm:$0xf]
    %v1304 = vld [vmem:[%s5 + $0xc] sm:$0xf]
    %v1305 = vld [vmem:[%s5 + $0x10] sm:$0xf]
    %v1306 = vld [vmem:[%s5 + $0x14] sm:$0xf]
    %v1307 = vld [vmem:[%s5 + $0x18] sm:$0xf]
    %v1308 = vld [vmem:[%s5 + $0x1c] sm:$0xf]
    %v1309 = vld [vmem:[%s5 + $0x20] sm:$0xf]
    %v1310 = vld [vmem:[%s5 + $0x24] sm:$0xf]
    %v1311 = vld [vmem:[%s5 + $0x28] sm:$0xf]
    %v1312 = vld [vmem:[%s5 + $0x2c] sm:$0xf]
    %v1313 = vld [vmem:[%s5 + $0x30] sm:$0xf]
    %v1314 = vld [vmem:[%s5 + $0x34] sm:$0xf]
    %v1315 = vld [vmem:[%s5 + $0x38] sm:$0xf]
    %v1316 = vld [vmem:[%s5 + $0x3c] sm:$0xf]
    %v1317 = vld [vmem:[%s5 + $0x40] sm:$0xf]
    %v1318 = vld [vmem:[%s5 + $0x44] sm:$0xf]
    %v1319 = vld [vmem:[%s5 + $0x48] sm:$0xf]
    %v1320 = vld [vmem:[%s5 + $0x4c] sm:$0xf]
    %v1321 = vld [vmem:[%s5 + $0x50] sm:$0xf]
    %v1322 = vld [vmem:[%s5 + $0x54] sm:$0xf]
    %v1323 = vld [vmem:[%s5 + $0x58] sm:$0xf]
    %v1324 = vld [vmem:[%s5 + $0x5c] sm:$0xf]
    %v1325 = vld [vmem:[%s5 + $0x60] sm:$0xf]
    %v1326 = vld [vmem:[%s5 + $0x64] sm:$0xf]
    %v1327 = vld [vmem:[%s5 + $0x68] sm:$0xf]
    %v1328 = vld [vmem:[%s5 + $0x6c] sm:$0xf]
    %v1329 = vld [vmem:[%s5 + $0x70] sm:$0xf]
    %v1330 = vld [vmem:[%s5 + $0x74] sm:$0xf]
    %v1331 = vld [vmem:[%s5 + $0x78] sm:$0xf]
    %v1332 = vld [vmem:[%s5 + $0x7c] sm:$0xf]
    %v1333 = vld [vmem:[%s5 + $0x80] sm:$0xf]
    %v1334 = vld [vmem:[%s5 + $0x84] sm:$0xf]
    %v1335 = vld [vmem:[%s5 + $0x88] sm:$0xf]
    %v1336 = vld [vmem:[%s5 + $0x8c] sm:$0xf]
    %v1337 = vld [vmem:[%s5 + $0x90] sm:$0xf]
    %v1338 = vld [vmem:[%s5 + $0x94] sm:$0xf]
    %v1339 = vld [vmem:[%s5 + $0x98] sm:$0xf]
    %v1340 = vld [vmem:[%s5 + $0x9c] sm:$0xf]
    %v1341 = vld [vmem:[%s5 + $0xa0] sm:$0xf]
    %v1342 = vld [vmem:[%s5 + $0xa4] sm:$0xf]
    %v1343 = vld [vmem:[%s5 + $0xa8] sm:$0xf]
    %v1344 = vld [vmem:[%s5 + $0xac] sm:$0xf]
    %v1345 = vld [vmem:[%s5 + $0xb0] sm:$0xf]
    %v1346 = vld [vmem:[%s5 + $0xb4] sm:$0xf]
    %v1347 = vld [vmem:[%s5 + $0xb8] sm:$0xf]
    %v1348 = vld [vmem:[%s5 + $0xbc] sm:$0xf]
    %v1349 = vld [vmem:[%s5 + $0xc0] sm:$0xf]
    %v1350 = vld [vmem:[%s5 + $0xc4] sm:$0xf]
    %v1351 = vld [vmem:[%s5 + $0xc8] sm:$0xf]
    %v1352 = vld [vmem:[%s5 + $0xcc] sm:$0xf]
    %v1353 = vld [vmem:[%s5 + $0xd0] sm:$0xf]
    %v1354 = vld [vmem:[%s5 + $0xd4] sm:$0xf]
    %v1355 = vld [vmem:[%s5 + $0xd8] sm:$0xf]
    %v1356 = vld [vmem:[%s5 + $0xdc] sm:$0xf]
    %v1357 = vld [vmem:[%s5 + $0xe0] sm:$0xf]
    %v1358 = vld [vmem:[%s5 + $0xe4] sm:$0xf]
    %v1359 = vld [vmem:[%s5 + $0xe8] sm:$0xf]
    %v1360 = vld [vmem:[%s5 + $0xec] sm:$0xf]
    %v1361 = vld [vmem:[%s5 + $0xf0] sm:$0xf]
    %v1362 = vld [vmem:[%s5 + $0xf4] sm:$0xf]
    %v1363 = vld [vmem:[%s5 + $0xf8] sm:$0xf]
    %v1364 = vld [vmem:[%s5 + $0xfc] sm:$0xf]
    %v1429 = vunpack.c.l.b16 %v1301
    %v1430 = vunpack.c.l.b16 %v1302
    %v1431 = vunpack.c.l.b16 %v1303
    %v1432 = vunpack.c.l.b16 %v1304
    %v1433 = vunpack.c.l.b16 %v1305
    %v1434 = vunpack.c.l.b16 %v1306
    %v1435 = vunpack.c.l.b16 %v1307
    %v1436 = vunpack.c.l.b16 %v1308
    %v1437 = vunpack.c.l.b16 %v1309
    %v1438 = vunpack.c.l.b16 %v1310
    %v1439 = vunpack.c.l.b16 %v1311
    %v1440 = vunpack.c.l.b16 %v1312
    %v1441 = vunpack.c.l.b16 %v1313
    %v1442 = vunpack.c.l.b16 %v1314
    %v1443 = vunpack.c.l.b16 %v1315
    %v1444 = vunpack.c.l.b16 %v1316
    %v1445 = vunpack.c.l.b16 %v1317
    %v1446 = vunpack.c.l.b16 %v1318
    %v1447 = vunpack.c.l.b16 %v1319
    %v1448 = vunpack.c.l.b16 %v1320
    %v1449 = vunpack.c.l.b16 %v1321
    %v1450 = vunpack.c.l.b16 %v1322
    %v1451 = vunpack.c.l.b16 %v1323
    %v1452 = vunpack.c.l.b16 %v1324
    %v1453 = vunpack.c.l.b16 %v1325
    %v1454 = vunpack.c.l.b16 %v1326
    %v1455 = vunpack.c.l.b16 %v1327
    %v1456 = vunpack.c.l.b16 %v1328
    %v1457 = vunpack.c.l.b16 %v1329
    %v1458 = vunpack.c.l.b16 %v1330
    %v1459 = vunpack.c.l.b16 %v1331
    %v1460 = vunpack.c.l.b16 %v1332
    %v1461 = vunpack.c.l.b16 %v1333
    %v1462 = vunpack.c.l.b16 %v1334
    %v1463 = vunpack.c.l.b16 %v1335
    %v1464 = vunpack.c.l.b16 %v1336
    %v1465 = vunpack.c.l.b16 %v1337
    %v1466 = vunpack.c.l.b16 %v1338
    %v1467 = vunpack.c.l.b16 %v1339
    %v1468 = vunpack.c.l.b16 %v1340
    %v1469 = vunpack.c.l.b16 %v1341
    %v1470 = vunpack.c.l.b16 %v1342
    %v1471 = vunpack.c.l.b16 %v1343
    %v1472 = vunpack.c.l.b16 %v1344
    %v1473 = vunpack.c.l.b16 %v1345
    %v1474 = vunpack.c.l.b16 %v1346
    %v1475 = vunpack.c.l.b16 %v1347
    %v1476 = vunpack.c.l.b16 %v1348
    %v1477 = vunpack.c.l.b16 %v1349
    %v1478 = vunpack.c.l.b16 %v1350
    %v1479 = vunpack.c.l.b16 %v1351
    %v1480 = vunpack.c.l.b16 %v1352
    %v1481 = vunpack.c.l.b16 %v1353
    %v1482 = vunpack.c.l.b16 %v1354
    %v1483 = vunpack.c.l.b16 %v1355
    %v1484 = vunpack.c.l.b16 %v1356
    %v1485 = vunpack.c.l.b16 %v1357
    %v1486 = vunpack.c.l.b16 %v1358
    %v1487 = vunpack.c.l.b16 %v1359
    %v1488 = vunpack.c.l.b16 %v1360
    %v1489 = vunpack.c.l.b16 %v1361
    %v1490 = vunpack.c.l.b16 %v1362
    %v1491 = vunpack.c.l.b16 %v1363
    %v1492 = vunpack.c.l.b16 %v1364
    %v1493 = vpack.c.b16 %v1430, %v1429
    %v1494 = vpack.c.b16 %v1432, %v1431
    %v1495 = vpack.c.b16 %v1434, %v1433
    %v1496 = vpack.c.b16 %v1436, %v1435
    %v1497 = vpack.c.b16 %v1438, %v1437
    %v1498 = vpack.c.b16 %v1440, %v1439
    %v1499 = vpack.c.b16 %v1442, %v1441
    %v1500 = vpack.c.b16 %v1444, %v1443
    %v1501 = vpack.c.b16 %v1446, %v1445
    %v1502 = vpack.c.b16 %v1448, %v1447
    %v1503 = vpack.c.b16 %v1450, %v1449
    %v1504 = vpack.c.b16 %v1452, %v1451
    %v1505 = vpack.c.b16 %v1454, %v1453
    %v1506 = vpack.c.b16 %v1456, %v1455
    %v1507 = vpack.c.b16 %v1458, %v1457
    %v1508 = vpack.c.b16 %v1460, %v1459
    %v1509 = vpack.c.b16 %v1462, %v1461
    %v1510 = vpack.c.b16 %v1464, %v1463
    %v1511 = vpack.c.b16 %v1466, %v1465
    %v1512 = vpack.c.b16 %v1468, %v1467
    %v1513 = vpack.c.b16 %v1470, %v1469
    %v1514 = vpack.c.b16 %v1472, %v1471
    %v1515 = vpack.c.b16 %v1474, %v1473
    %v1516 = vpack.c.b16 %v1476, %v1475
    %v1517 = vpack.c.b16 %v1478, %v1477
    %v1518 = vpack.c.b16 %v1480, %v1479
    %v1519 = vpack.c.b16 %v1482, %v1481
    %v1520 = vpack.c.b16 %v1484, %v1483
    %v1521 = vpack.c.b16 %v1486, %v1485
    %v1522 = vpack.c.b16 %v1488, %v1487
    %v1523 = vpack.c.b16 %v1490, %v1489
    %v1524 = vpack.c.b16 %v1492, %v1491
    %1557 = vmatprep.subr.bf16.mxu0 0
    %1558 = vmatpush1.bf16.msra.mxu0 %v1493
    %1559 = vmatprep.subr.bf16.mxu0 0
    %1560 = vmatpush1.bf16.msra.mxu0 %v1494
    %1561 = vmatprep.subr.bf16.mxu0 0
    %1562 = vmatpush1.bf16.msra.mxu0 %v1495
    %1563 = vmatprep.subr.bf16.mxu0 0
    %1564 = vmatpush1.bf16.msra.mxu0 %v1496
    %1565 = vmatprep.subr.bf16.mxu0 0
    %1566 = vmatpush1.bf16.msra.mxu0 %v1497
    %1567 = vmatprep.subr.bf16.mxu0 0
    %1568 = vmatpush1.bf16.msra.mxu0 %v1498
    %1569 = vmatprep.subr.bf16.mxu0 0
    %1570 = vmatpush1.bf16.msra.mxu0 %v1499
    %1571 = vmatprep.subr.bf16.mxu0 0
    %1572 = vmatpush1.bf16.msra.mxu0 %v1500
    %1573 = vmatprep.subr.bf16.mxu0 0
    %1574 = vmatpush1.bf16.msra.mxu0 %v1501
    %1575 = vmatprep.subr.bf16.mxu0 0
    %1576 = vmatpush1.bf16.msra.mxu0 %v1502
    %1577 = vmatprep.subr.bf16.mxu0 0
    %1578 = vmatpush1.bf16.msra.mxu0 %v1503
    %1579 = vmatprep.subr.bf16.mxu0 0
    %1580 = vmatpush1.bf16.msra.mxu0 %v1504
    %1581 = vmatprep.subr.bf16.mxu0 0
    %1582 = vmatpush1.bf16.msra.mxu0 %v1505
    %1583 = vmatprep.subr.bf16.mxu0 0
    %1584 = vmatpush1.bf16.msra.mxu0 %v1506
    %1585 = vmatprep.subr.bf16.mxu0 0
    %1586 = vmatpush1.bf16.msra.mxu0 %v1507
    %1587 = vmatprep.subr.bf16.mxu0 0
    %1588 = vmatpush1.bf16.msra.mxu0 %v1508
    %1589 = vmatprep.mubr.bf16.mxu0 %v1298
    %1590 = vmatmul.mubr.bf16.gmra.mrb[0].mxu0 %v1297
    %v1591 = vpop.f32.mrb[0].mxu0
    %v1592 = vadd.f32 0.0, %v1591
    %v1593 = vpop.f32.mrb[0].mxu0
    %v1594 = vpop.f32.mrb[0].mxu0
    %v1595 = vpop.f32.mrb[0].mxu0
    %1596 = vdwg.mxu0
    %1597 = vmatprep.subr.bf16.mxu0 0
    %1598 = vmatpush1.bf16.msra.mxu0 %v1509
    %1599 = vmatprep.subr.bf16.mxu0 0
    %1600 = vmatpush1.bf16.msra.mxu0 %v1510
    %1601 = vmatprep.subr.bf16.mxu0 0
    %1602 = vmatpush1.bf16.msra.mxu0 %v1511
    %1603 = vmatprep.subr.bf16.mxu0 0
    %1604 = vmatpush1.bf16.msra.mxu0 %v1512
    %1605 = vmatprep.subr.bf16.mxu0 0
    %1606 = vmatpush1.bf16.msra.mxu0 %v1513
    %1607 = vmatprep.subr.bf16.mxu0 0
    %1608 = vmatpush1.bf16.msra.mxu0 %v1514
    %1609 = vmatprep.subr.bf16.mxu0 0
    %1610 = vmatpush1.bf16.msra.mxu0 %v1515
    %1611 = vmatprep.subr.bf16.mxu0 0
    %1612 = vmatpush1.bf16.msra.mxu0 %v1516
    %1613 = vmatprep.subr.bf16.mxu0 0
    %1614 = vmatpush1.bf16.msra.mxu0 %v1517
    %1615 = vmatprep.subr.bf16.mxu0 0
    %1616 = vmatpush1.bf16.msra.mxu0 %v1518
    %1617 = vmatprep.subr.bf16.mxu0 0
    %1618 = vmatpush1.bf16.msra.mxu0 %v1519
    %1619 = vmatprep.subr.bf16.mxu0 0
    %1620 = vmatpush1.bf16.msra.mxu0 %v1520
    %1621 = vmatprep.subr.bf16.mxu0 0
    %1622 = vmatpush1.bf16.msra.mxu0 %v1521
    %1623 = vmatprep.subr.bf16.mxu0 0
    %1624 = vmatpush1.bf16.msra.mxu0 %v1522
    %1625 = vmatprep.subr.bf16.mxu0 0
    %1626 = vmatpush1.bf16.msra.mxu0 %v1523
    %1627 = vmatprep.subr.bf16.mxu0 0
    %1628 = vmatpush1.bf16.msra.mxu0 %v1524
    %1629 = vmatprep.mubr.bf16.mxu0 %v1300
    %1630 = vmatmul.mubr.bf16.gmra.mrb[0].mxu0 %v1299
    %v1631 = vpop.f32.mrb[0].mxu0
    %v1632 = vadd.f32 %v1592, %v1631
    %v1633 = vpop.f32.mrb[0].mxu0
    %v1634 = vpop.f32.mrb[0].mxu0
    %v1635 = vpop.f32.mrb[0].mxu0
    %1636 = vdwg.mxu0
    %v1637 = vpack.c.bf16 %v1632, %v1632
    %v1638 = vld [vmem:[%s6] sm:$0xff]
    %v1639 = vld [vmem:[%s6 + $0x8] sm:$0xff]
    %v1640 = vld [vmem:[%s6 + $0x10] sm:$0xff]
    %v1641 = vld [vmem:[%s6 + $0x18] sm:$0xff]
    %v1642 = vld [vmem:[%s6 + $0x20] sm:$0xff]
    %v1643 = vld [vmem:[%s6 + $0x28] sm:$0xff]
    %v1644 = vld [vmem:[%s6 + $0x30] sm:$0xff]
    %v1645 = vld [vmem:[%s6 + $0x38] sm:$0xff]
    %v1646 = vld [vmem:[%s6 + $0x40] sm:$0xff]
    %v1647 = vld [vmem:[%s6 + $0x48] sm:$0xff]
    %v1648 = vld [vmem:[%s6 + $0x50] sm:$0xff]
    %v1649 = vld [vmem:[%s6 + $0x58] sm:$0xff]
    %v1650 = vld [vmem:[%s6 + $0x60] sm:$0xff]
    %v1651 = vld [vmem:[%s6 + $0x68] sm:$0xff]
    %v1652 = vld [vmem:[%s6 + $0x70] sm:$0xff]
    %v1653 = vld [vmem:[%s6 + $0x78] sm:$0xff]
    %v1654 = vld [vmem:[%s7] sm:$0x3]
    %v1656 = vlaneseq
    %v1657 = vshrl.u32 %v1656, 7
    %v1658 = vsub.s32 0, %v1657
    %v1659 = vrot.slane %v1654, %v1658
    %v1660 = vlaneseq
    %v1661 = vshrl.u32 %v1660, 7
    %v1662 = vsub.s32 1, %v1661
    %v1663 = vrot.slane %v1654, %v1662
    %v1682 = vunpack.c.l.b16 %v1638
    %v1683 = vunpack.c.h.b16 %v1638
    %v1684 = vunpack.c.l.b16 %v1639
    %v1685 = vunpack.c.h.b16 %v1639
    %v1686 = vunpack.c.l.b16 %v1640
    %v1687 = vunpack.c.h.b16 %v1640
    %v1688 = vunpack.c.l.b16 %v1641
    %v1689 = vunpack.c.h.b16 %v1641
    %v1690 = vunpack.c.l.b16 %v1642
    %v1691 = vunpack.c.h.b16 %v1642
    %v1692 = vunpack.c.l.b16 %v1643
    %v1693 = vunpack.c.h.b16 %v1643
    %v1694 = vunpack.c.l.b16 %v1644
    %v1695 = vunpack.c.h.b16 %v1644
    %v1696 = vunpack.c.l.b16 %v1645
    %v1697 = vunpack.c.h.b16 %v1645
    %v1698 = vunpack.c.l.b16 %v1646
    %v1699 = vunpack.c.h.b16 %v1646
    %v1700 = vunpack.c.l.b16 %v1647
    %v1701 = vunpack.c.h.b16 %v1647
    %v1702 = vunpack.c.l.b16 %v1648
    %v1703 = vunpack.c.h.b16 %v1648
    %v1704 = vunpack.c.l.b16 %v1649
    %v1705 = vunpack.c.h.b16 %v1649
    %v1706 = vunpack.c.l.b16 %v1650
    %v1707 = vunpack.c.h.b16 %v1650
    %v1708 = vunpack.c.l.b16 %v1651
    %v1709 = vunpack.c.h.b16 %v1651
    %v1710 = vunpack.c.l.b16 %v1652
    %v1711 = vunpack.c.h.b16 %v1652
    %v1712 = vunpack.c.l.b16 %v1653
    %v1713 = vunpack.c.h.b16 %v1653
    %v1714 = vpack.c.b16 %v1684, %v1682
    %v1715 = vpack.c.b16 %v1685, %v1683
    %v1716 = vpack.c.b16 %v1688, %v1686
    %v1717 = vpack.c.b16 %v1689, %v1687
    %v1718 = vpack.c.b16 %v1692, %v1690
    %v1719 = vpack.c.b16 %v1693, %v1691
    %v1720 = vpack.c.b16 %v1696, %v1694
    %v1721 = vpack.c.b16 %v1697, %v1695
    %v1722 = vpack.c.b16 %v1700, %v1698
    %v1723 = vpack.c.b16 %v1701, %v1699
    %v1724 = vpack.c.b16 %v1704, %v1702
    %v1725 = vpack.c.b16 %v1705, %v1703
    %v1726 = vpack.c.b16 %v1708, %v1706
    %v1727 = vpack.c.b16 %v1709, %v1707
    %v1728 = vpack.c.b16 %v1712, %v1710
    %v1729 = vpack.c.b16 %v1713, %v1711
    %1746 = vmatprep.subr.bf16.mxu0 %v1715
    %1747 = vmatpush1.bf16.msra.mxu0 %v1714
    %1748 = vmatprep.subr.bf16.mxu0 %v1717
    %1749 = vmatpush1.bf16.msra.mxu0 %v1716
    %1750 = vmatprep.subr.bf16.mxu0 %v1719
    %1751 = vmatpush1.bf16.msra.mxu0 %v1718
    %1752 = vmatprep.subr.bf16.mxu0 %v1721
    %1753 = vmatpush1.bf16.msra.mxu0 %v1720
    %1754 = vmatprep.subr.bf16.mxu0 %v1723
    %1755 = vmatpush1.bf16.msra.mxu0 %v1722
    %1756 = vmatprep.subr.bf16.mxu0 %v1725
    %1757 = vmatpush1.bf16.msra.mxu0 %v1724
    %1758 = vmatprep.subr.bf16.mxu0 %v1727
    %1759 = vmatpush1.bf16.msra.mxu0 %v1726
    %1760 = vmatprep.subr.bf16.mxu0 %v1729
    %1761 = vmatpush1.bf16.msra.mxu0 %v1728
    %1762 = vmatprep.subr.bf16.mxu0 0
    %1763 = vmatpush1.bf16.msra.mxu0 0
    %1764 = vmatprep.subr.bf16.mxu0 0
    %1765 = vmatpush1.bf16.msra.mxu0 0
    %1766 = vmatprep.subr.bf16.mxu0 0
    %1767 = vmatpush1.bf16.msra.mxu0 0
    %1768 = vmatprep.subr.bf16.mxu0 0
    %1769 = vmatpush1.bf16.msra.mxu0 0
    %1770 = vmatprep.subr.bf16.mxu0 0
    %1771 = vmatpush1.bf16.msra.mxu0 0
    %1772 = vmatprep.subr.bf16.mxu0 0
    %1773 = vmatpush1.bf16.msra.mxu0 0
    %1774 = vmatprep.subr.bf16.mxu0 0
    %1775 = vmatpush1.bf16.msra.mxu0 0
    %1776 = vmatprep.subr.bf16.mxu0 0
    %1777 = vmatpush1.bf16.msra.mxu0 0
    %1778 = vmatprep.mubr.bf16.mxu0 0
    %1779 = vmatmul.mubr.bf16.gmra.mrb[0].mxu0 %v1637
    %v1780 = vpop.f32.mrb[0].mxu0
    %v1781 = vadd.f32 %v1659, %v1780
    %v1782 = vpop.f32.mrb[0].mxu0
    %v1783 = vadd.f32 %v1663, %v1782
    %v1784 = vpop.f32.mrb[0].mxu0
    %v1785 = vpop.f32.mrb[0].mxu0
    %1786 = vdwg.mxu0
    %v1787 = vmax.f32 %v1781, 0.0
    %v1788 = vmax.f32 %v1783, 0.0
    %v1789 = vpack.c.bf16 %v1787, %v1787
    %v1790 = vld [vmem:[%s8] sm:$0xf]
    %v1791 = vld [vmem:[%s8 + $0x4] sm:$0xf]
    %v1792 = vld [vmem:[%s8 + $0x8] sm:$0xf]
    %v1793 = vld [vmem:[%s8 + $0xc] sm:$0xf]
    %v1794 = vld [vmem:[%s8 + $0x10] sm:$0xf]
    %v1795 = vld [vmem:[%s8 + $0x14] sm:$0xf]
    %v1796 = vld [vmem:[%s8 + $0x18] sm:$0xf]
    %v1797 = vld [vmem:[%s8 + $0x1c] sm:$0xf]
    %v1798 = vld [vmem:[%s8 + $0x20] sm:$0xf]
    %v1799 = vld [vmem:[%s8 + $0x24] sm:$0xf]
    %v1800 = vld [vmem:[%s8 + $0x28] sm:$0xf]
    %v1801 = vld [vmem:[%s8 + $0x2c] sm:$0xf]
    %v1802 = vld [vmem:[%s8 + $0x30] sm:$0xf]
    %v1803 = vld [vmem:[%s8 + $0x34] sm:$0xf]
    %v1804 = vld [vmem:[%s8 + $0x38] sm:$0xf]
    %v1805 = vld [vmem:[%s8 + $0x3c] sm:$0xf]
    %v1806 = vld [vmem:[%s9] sm:$0x1]
    %v1808 = vlaneseq
    %v1809 = vshrl.u32 %v1808, 7
    %v1810 = vsub.s32 0, %v1809
    %v1811 = vrot.slane %v1806, %v1810
    %v1829 = vunpack.c.l.b16 %v1790
    %v1830 = vunpack.c.l.b16 %v1791
    %v1831 = vunpack.c.l.b16 %v1792
    %v1832 = vunpack.c.l.b16 %v1793
    %v1833 = vunpack.c.l.b16 %v1794
    %v1834 = vunpack.c.l.b16 %v1795
    %v1835 = vunpack.c.l.b16 %v1796
    %v1836 = vunpack.c.l.b16 %v1797
    %v1837 = vunpack.c.l.b16 %v1798
    %v1838 = vunpack.c.l.b16 %v1799
    %v1839 = vunpack.c.l.b16 %v1800
    %v1840 = vunpack.c.l.b16 %v1801
    %v1841 = vunpack.c.l.b16 %v1802
    %v1842 = vunpack.c.l.b16 %v1803
    %v1843 = vunpack.c.l.b16 %v1804
    %v1844 = vunpack.c.l.b16 %v1805
    %v1845 = vpack.c.b16 %v1830, %v1829
    %v1846 = vpack.c.b16 %v1832, %v1831
    %v1847 = vpack.c.b16 %v1834, %v1833
    %v1848 = vpack.c.b16 %v1836, %v1835
    %v1849 = vpack.c.b16 %v1838, %v1837
    %v1850 = vpack.c.b16 %v1840, %v1839
    %v1851 = vpack.c.b16 %v1842, %v1841
    %v1852 = vpack.c.b16 %v1844, %v1843
    %1861 = vmatprep.subr.bf16.mxu0 0
    %1862 = vmatpush1.bf16.msra.mxu0 %v1845
    %1863 = vmatprep.subr.bf16.mxu0 0
    %1864 = vmatpush1.bf16.msra.mxu0 %v1846
    %1865 = vmatprep.subr.bf16.mxu0 0
    %1866 = vmatpush1.bf16.msra.mxu0 %v1847
    %1867 = vmatprep.subr.bf16.mxu0 0
    %1868 = vmatpush1.bf16.msra.mxu0 %v1848
    %1869 = vmatprep.subr.bf16.mxu0 0
    %1870 = vmatpush1.bf16.msra.mxu0 %v1849
    %1871 = vmatprep.subr.bf16.mxu0 0
    %1872 = vmatpush1.bf16.msra.mxu0 %v1850
    %1873 = vmatprep.subr.bf16.mxu0 0
    %1874 = vmatpush1.bf16.msra.mxu0 %v1851
    %1875 = vmatprep.subr.bf16.mxu0 0
    %1876 = vmatpush1.bf16.msra.mxu0 %v1852
    %1877 = vmatprep.subr.bf16.mxu0 0
    %1878 = vmatpush1.bf16.msra.mxu0 0
    %1879 = vmatprep.subr.bf16.mxu0 0
    %1880 = vmatpush1.bf16.msra.mxu0 0
    %1881 = vmatprep.subr.bf16.mxu0 0
    %1882 = vmatpush1.bf16.msra.mxu0 0
    %1883 = vmatprep.subr.bf16.mxu0 0
    %1884 = vmatpush1.bf16.msra.mxu0 0
    %1885 = vmatprep.subr.bf16.mxu0 0
    %1886 = vmatpush1.bf16.msra.mxu0 0
    %1887 = vmatprep.subr.bf16.mxu0 0
    %1888 = vmatpush1.bf16.msra.mxu0 0
    %1889 = vmatprep.subr.bf16.mxu0 0
    %1890 = vmatpush1.bf16.msra.mxu0 0
    %1891 = vmatprep.subr.bf16.mxu0 0
    %1892 = vmatpush1.bf16.msra.mxu0 0
    %1893 = vmatprep.mubr.bf16.mxu0 0
    %1894 = vmatmul.mubr.bf16.gmra.mrb[0].mxu0 %v1789
    %v1895 = vpop.f32.mrb[0].mxu0
    %v1896 = vadd.f32 %v1811, %v1895
    %v1897 = vpop.f32.mrb[0].mxu0
    %v1898 = vpop.f32.mrb[0].mxu0
    %v1899 = vpop.f32.mrb[0].mxu0
    %1900 = vdwg.mxu0
    %vm1901 = vcmask 15360
    %1902 = vst.msk [vmem:[%s12] sm:$0xff] %vm1901, %v1896
    %v1903 = vpack.c.bf16 %v1788, %v1788
    %v1904 = vld [vmem:[%s10] sm:$0xff]
    %v1905 = vld [vmem:[%s10 + $0x8] sm:$0xff]
    %v1906 = vld [vmem:[%s10 + $0x10] sm:$0xff]
    %v1907 = vld [vmem:[%s10 + $0x18] sm:$0xff]
    %v1908 = vld [vmem:[%s10 + $0x20] sm:$0xff]
    %v1909 = vld [vmem:[%s10 + $0x28] sm:$0xff]
    %v1910 = vld [vmem:[%s10 + $0x30] sm:$0xff]
    %v1911 = vld [vmem:[%s10 + $0x38] sm:$0xff]
    %v1912 = vld [vmem:[%s10 + $0x40] sm:$0xff]
    %v1913 = vld [vmem:[%s10 + $0x48] sm:$0xff]
    %v1914 = vld [vmem:[%s10 + $0x50] sm:$0xff]
    %v1915 = vld [vmem:[%s10 + $0x58] sm:$0xff]
    %v1916 = vld [vmem:[%s10 + $0x60] sm:$0xff]
    %v1917 = vld [vmem:[%s10 + $0x68] sm:$0xff]
    %v1918 = vld [vmem:[%s10 + $0x70] sm:$0xff]
    %v1919 = vld [vmem:[%s10 + $0x78] sm:$0xff]
    %v1920 = vld [vmem:[%s10 + $0x80] sm:$0xff]
    %v1921 = vld [vmem:[%s10 + $0x88] sm:$0xff]
    %v1922 = vld [vmem:[%s10 + $0x90] sm:$0xff]
    %v1923 = vld [vmem:[%s10 + $0x98] sm:$0xff]
    %v1924 = vld [vmem:[%s10 + $0xa0] sm:$0xff]
    %v1925 = vld [vmem:[%s10 + $0xa8] sm:$0xff]
    %v1926 = vld [vmem:[%s10 + $0xb0] sm:$0xff]
    %v1927 = vld [vmem:[%s10 + $0xb8] sm:$0xff]
    %v1928 = vld [vmem:[%s10 + $0xc0] sm:$0xff]
    %v1929 = vld [vmem:[%s10 + $0xc8] sm:$0xff]
    %v1930 = vld [vmem:[%s10 + $0xd0] sm:$0xff]
    %v1931 = vld [vmem:[%s10 + $0xd8] sm:$0xff]
    %v1932 = vld [vmem:[%s10 + $0xe0] sm:$0xff]
    %v1933 = vld [vmem:[%s10 + $0xe8] sm:$0xff]
    %v1934 = vld [vmem:[%s10 + $0xf0] sm:$0xff]
    %v1935 = vld [vmem:[%s10 + $0xf8] sm:$0xff]
    %v1936 = vld [vmem:[%s11] sm:$0xff]
    %v1938 = vlaneseq
    %v1939 = vshrl.u32 %v1938, 7
    %v1940 = vsub.s32 0, %v1939
    %v1941 = vrot.slane %v1936, %v1940
    %v1942 = vlaneseq
    %v1943 = vshrl.u32 %v1942, 7
    %v1944 = vsub.s32 1, %v1943
    %v1945 = vrot.slane %v1936, %v1944
    %v1946 = vlaneseq
    %v1947 = vshrl.u32 %v1946, 7
    %v1948 = vsub.s32 2, %v1947
    %v1949 = vrot.slane %v1936, %v1948
    %v1950 = vlaneseq
    %v1951 = vshrl.u32 %v1950, 7
    %v1952 = vsub.s32 3, %v1951
    %v1953 = vrot.slane %v1936, %v1952
    %v1954 = vlaneseq
    %v1955 = vshrl.u32 %v1954, 7
    %v1956 = vsub.s32 4, %v1955
    %v1957 = vrot.slane %v1936, %v1956
    %v1958 = vlaneseq
    %v1959 = vshrl.u32 %v1958, 7
    %v1960 = vsub.s32 5, %v1959
    %v1961 = vrot.slane %v1936, %v1960
    %v1962 = vlaneseq
    %v1963 = vshrl.u32 %v1962, 7
    %v1964 = vsub.s32 6, %v1963
    %v1965 = vrot.slane %v1936, %v1964
    %v1966 = vlaneseq
    %v1967 = vshrl.u32 %v1966, 7
    %v1968 = vsub.s32 7, %v1967
    %v1969 = vrot.slane %v1936, %v1968
    %v2010 = vunpack.c.l.b16 %v1904
    %v2011 = vunpack.c.h.b16 %v1904
    %v2012 = vunpack.c.l.b16 %v1905
    %v2013 = vunpack.c.h.b16 %v1905
    %v2014 = vunpack.c.l.b16 %v1906
    %v2015 = vunpack.c.h.b16 %v1906
    %v2016 = vunpack.c.l.b16 %v1907
    %v2017 = vunpack.c.h.b16 %v1907
    %v2018 = vunpack.c.l.b16 %v1908
    %v2019 = vunpack.c.h.b16 %v1908
    %v2020 = vunpack.c.l.b16 %v1909
    %v2021 = vunpack.c.h.b16 %v1909
    %v2022 = vunpack.c.l.b16 %v1910
    %v2023 = vunpack.c.h.b16 %v1910
    %v2024 = vunpack.c.l.b16 %v1911
    %v2025 = vunpack.c.h.b16 %v1911
    %v2026 = vunpack.c.l.b16 %v1912
    %v2027 = vunpack.c.h.b16 %v1912
    %v2028 = vunpack.c.l.b16 %v1913
    %v2029 = vunpack.c.h.b16 %v1913
    %v2030 = vunpack.c.l.b16 %v1914
    %v2031 = vunpack.c.h.b16 %v1914
    %v2032 = vunpack.c.l.b16 %v1915
    %v2033 = vunpack.c.h.b16 %v1915
    %v2034 = vunpack.c.l.b16 %v1916
    %v2035 = vunpack.c.h.b16 %v1916
    %v2036 = vunpack.c.l.b16 %v1917
    %v2037 = vunpack.c.h.b16 %v1917
    %v2038 = vunpack.c.l.b16 %v1918
    %v2039 = vunpack.c.h.b16 %v1918
    %v2040 = vunpack.c.l.b16 %v1919
    %v2041 = vunpack.c.h.b16 %v1919
    %v2042 = vunpack.c.l.b16 %v1920
    %v2043 = vunpack.c.h.b16 %v1920
    %v2044 = vunpack.c.l.b16 %v1921
    %v2045 = vunpack.c.h.b16 %v1921
    %v2046 = vunpack.c.l.b16 %v1922
    %v2047 = vunpack.c.h.b16 %v1922
    %v2048 = vunpack.c.l.b16 %v1923
    %v2049 = vunpack.c.h.b16 %v1923
    %v2050 = vunpack.c.l.b16 %v1924
    %v2051 = vunpack.c.h.b16 %v1924
    %v2052 = vunpack.c.l.b16 %v1925
    %v2053 = vunpack.c.h.b16 %v1925
    %v2054 = vunpack.c.l.b16 %v1926
    %v2055 = vunpack.c.h.b16 %v1926
    %v2056 = vunpack.c.l.b16 %v1927
    %v2057 = vunpack.c.h.b16 %v1927
    %v2058 = vunpack.c.l.b16 %v1928
    %v2059 = vunpack.c.h.b16 %v1928
    %v2060 = vunpack.c.l.b16 %v1929
    %v2061 = vunpack.c.h.b16 %v1929
    %v2062 = vunpack.c.l.b16 %v1930
    %v2063 = vunpack.c.h.b16 %v1930
    %v2064 = vunpack.c.l.b16 %v1931
    %v2065 = vunpack.c.h.b16 %v1931
    %v2066 = vunpack.c.l.b16 %v1932
    %v2067 = vunpack.c.h.b16 %v1932
    %v2068 = vunpack.c.l.b16 %v1933
    %v2069 = vunpack.c.h.b16 %v1933
    %v2070 = vunpack.c.l.b16 %v1934
    %v2071 = vunpack.c.h.b16 %v1934
    %v2072 = vunpack.c.l.b16 %v1935
    %v2073 = vunpack.c.h.b16 %v1935
    %v2074 = vpack.c.b16 %v2018, %v2010
    %v2075 = vpack.c.b16 %v2019, %v2011
    %v2076 = vpack.c.b16 %v2020, %v2012
    %v2077 = vpack.c.b16 %v2021, %v2013
    %v2078 = vpack.c.b16 %v2022, %v2014
    %v2079 = vpack.c.b16 %v2023, %v2015
    %v2080 = vpack.c.b16 %v2024, %v2016
    %v2081 = vpack.c.b16 %v2025, %v2017
    %v2082 = vpack.c.b16 %v2034, %v2026
    %v2083 = vpack.c.b16 %v2035, %v2027
    %v2084 = vpack.c.b16 %v2036, %v2028
    %v2085 = vpack.c.b16 %v2037, %v2029
    %v2086 = vpack.c.b16 %v2038, %v2030
    %v2087 = vpack.c.b16 %v2039, %v2031
    %v2088 = vpack.c.b16 %v2040, %v2032
    %v2089 = vpack.c.b16 %v2041, %v2033
    %v2090 = vpack.c.b16 %v2050, %v2042
    %v2091 = vpack.c.b16 %v2051, %v2043
    %v2092 = vpack.c.b16 %v2052, %v2044
    %v2093 = vpack.c.b16 %v2053, %v2045
    %v2094 = vpack.c.b16 %v2054, %v2046
    %v2095 = vpack.c.b16 %v2055, %v2047
    %v2096 = vpack.c.b16 %v2056, %v2048
    %v2097 = vpack.c.b16 %v2057, %v2049
    %v2098 = vpack.c.b16 %v2066, %v2058
    %v2099 = vpack.c.b16 %v2067, %v2059
    %v2100 = vpack.c.b16 %v2068, %v2060
    %v2101 = vpack.c.b16 %v2069, %v2061
    %v2102 = vpack.c.b16 %v2070, %v2062
    %v2103 = vpack.c.b16 %v2071, %v2063
    %v2104 = vpack.c.b16 %v2072, %v2064
    %v2105 = vpack.c.b16 %v2073, %v2065
    %v2139 = vsel %vm742, %v1903, 0
    %2141 = vmatprep.subr.bf16.mxu0 %v2075
    %2142 = vmatpush1.bf16.msra.mxu0 %v2074
    %2143 = vmatprep.subr.bf16.mxu0 %v2083
    %2144 = vmatpush1.bf16.msra.mxu0 %v2082
    %2145 = vmatprep.subr.bf16.mxu0 %v2091
    %2146 = vmatpush1.bf16.msra.mxu0 %v2090
    %2147 = vmatprep.subr.bf16.mxu0 %v2099
    %2148 = vmatpush1.bf16.msra.mxu0 %v2098
    %2149 = vmatprep.subr.bf16.mxu0 0
    %2150 = vmatpush1.bf16.msra.mxu0 0
    %2151 = vmatprep.subr.bf16.mxu0 0
    %2152 = vmatpush1.bf16.msra.mxu0 0
    %2153 = vmatprep.subr.bf16.mxu0 0
    %2154 = vmatpush1.bf16.msra.mxu0 0
    %2155 = vmatprep.subr.bf16.mxu0 0
    %2156 = vmatpush1.bf16.msra.mxu0 0
    %2157 = vmatprep.subr.bf16.mxu0 0
    %2158 = vmatpush1.bf16.msra.mxu0 0
    %2159 = vmatprep.subr.bf16.mxu0 0
    %2160 = vmatpush1.bf16.msra.mxu0 0
    %2161 = vmatprep.subr.bf16.mxu0 0
    %2162 = vmatpush1.bf16.msra.mxu0 0
    %2163 = vmatprep.subr.bf16.mxu0 0
    %2164 = vmatpush1.bf16.msra.mxu0 0
    %2165 = vmatprep.subr.bf16.mxu0 0
    %2166 = vmatpush1.bf16.msra.mxu0 0
    %2167 = vmatprep.subr.bf16.mxu0 0
    %2168 = vmatpush1.bf16.msra.mxu0 0
    %2169 = vmatprep.subr.bf16.mxu0 0
    %2170 = vmatpush1.bf16.msra.mxu0 0
    %2171 = vmatprep.subr.bf16.mxu0 0
    %2172 = vmatpush1.bf16.msra.mxu0 0
    %2173 = vmatprep.mubr.bf16.mxu0 0
    %2174 = vmatmul.mubr.bf16.gmra.mrb[0].mxu0 %v2139
    %v2175 = vpop.f32.mrb[0].mxu0
    %v2176 = vadd.f32 %v1941, %v2175
    %v2177 = vpop.f32.mrb[0].mxu0
    %v2178 = vadd.f32 %v1945, %v2177
    %v2179 = vpop.f32.mrb[0].mxu0
    %v2180 = vpop.f32.mrb[0].mxu0
    %2181 = vdwg.mxu0
    %2182 = vmatprep.subr.bf16.mxu0 %v2077
    %2183 = vmatpush1.bf16.msra.mxu0 %v2076
    %2184 = vmatprep.subr.bf16.mxu0 %v2085
    %2185 = vmatpush1.bf16.msra.mxu0 %v2084
    %2186 = vmatprep.subr.bf16.mxu0 %v2093
    %2187 = vmatpush1.bf16.msra.mxu0 %v2092
    %2188 = vmatprep.subr.bf16.mxu0 %v2101
    %2189 = vmatpush1.bf16.msra.mxu0 %v2100
    %2190 = vmatprep.subr.bf16.mxu0 0
    %2191 = vmatpush1.bf16.msra.mxu0 0
    %2192 = vmatprep.subr.bf16.mxu0 0
    %2193 = vmatpush1.bf16.msra.mxu0 0
    %2194 = vmatprep.subr.bf16.mxu0 0
    %2195 = vmatpush1.bf16.msra.mxu0 0
    %2196 = vmatprep.subr.bf16.mxu0 0
    %2197 = vmatpush1.bf16.msra.mxu0 0
    %2198 = vmatprep.subr.bf16.mxu0 0
    %2199 = vmatpush1.bf16.msra.mxu0 0
    %2200 = vmatprep.subr.bf16.mxu0 0
    %2201 = vmatpush1.bf16.msra.mxu0 0
    %2202 = vmatprep.subr.bf16.mxu0 0
    %2203 = vmatpush1.bf16.msra.mxu0 0
    %2204 = vmatprep.subr.bf16.mxu0 0
    %2205 = vmatpush1.bf16.msra.mxu0 0
    %2206 = vmatprep.subr.bf16.mxu0 0
    %2207 = vmatpush1.bf16.msra.mxu0 0
    %2208 = vmatprep.subr.bf16.mxu0 0
    %2209 = vmatpush1.bf16.msra.mxu0 0
    %2210 = vmatprep.subr.bf16.mxu0 0
    %2211 = vmatpush1.bf16.msra.mxu0 0
    %2212 = vmatprep.subr.bf16.mxu0 0
    %2213 = vmatpush1.bf16.msra.mxu0 0
    %2214 = vmatprep.mubr.bf16.mxu0 0
    %2215 = vmatmul.mubr.bf16.gmra.mrb[0].mxu0 %v2139
    %v2216 = vpop.f32.mrb[0].mxu0
    %v2217 = vadd.f32 %v1949, %v2216
    %v2218 = vpop.f32.mrb[0].mxu0
    %v2219 = vadd.f32 %v1953, %v2218
    %v2220 = vpop.f32.mrb[0].mxu0
    %v2221 = vpop.f32.mrb[0].mxu0
    %2222 = vdwg.mxu0
    %2223 = vmatprep.subr.bf16.mxu0 %v2079
    %2224 = vmatpush1.bf16.msra.mxu0 %v2078
    %2225 = vmatprep.subr.bf16.mxu0 %v2087
    %2226 = vmatpush1.bf16.msra.mxu0 %v2086
    %2227 = vmatprep.subr.bf16.mxu0 %v2095
    %2228 = vmatpush1.bf16.msra.mxu0 %v2094
    %2229 = vmatprep.subr.bf16.mxu0 %v2103
    %2230 = vmatpush1.bf16.msra.mxu0 %v2102
    %2231 = vmatprep.subr.bf16.mxu0 0
    %2232 = vmatpush1.bf16.msra.mxu0 0
    %2233 = vmatprep.subr.bf16.mxu0 0
    %2234 = vmatpush1.bf16.msra.mxu0 0
    %2235 = vmatprep.subr.bf16.mxu0 0
    %2236 = vmatpush1.bf16.msra.mxu0 0
    %2237 = vmatprep.subr.bf16.mxu0 0
    %2238 = vmatpush1.bf16.msra.mxu0 0
    %2239 = vmatprep.subr.bf16.mxu0 0
    %2240 = vmatpush1.bf16.msra.mxu0 0
    %2241 = vmatprep.subr.bf16.mxu0 0
    %2242 = vmatpush1.bf16.msra.mxu0 0
    %2243 = vmatprep.subr.bf16.mxu0 0
    %2244 = vmatpush1.bf16.msra.mxu0 0
    %2245 = vmatprep.subr.bf16.mxu0 0
    %2246 = vmatpush1.bf16.msra.mxu0 0
    %2247 = vmatprep.subr.bf16.mxu0 0
    %2248 = vmatpush1.bf16.msra.mxu0 0
    %2249 = vmatprep.subr.bf16.mxu0 0
    %2250 = vmatpush1.bf16.msra.mxu0 0
    %2251 = vmatprep.subr.bf16.mxu0 0
    %2252 = vmatpush1.bf16.msra.mxu0 0
    %2253 = vmatprep.subr.bf16.mxu0 0
    %2254 = vmatpush1.bf16.msra.mxu0 0
    %2255 = vmatprep.mubr.bf16.mxu0 0
    %2256 = vmatmul.mubr.bf16.gmra.mrb[0].mxu0 %v2139
    %v2257 = vpop.f32.mrb[0].mxu0
    %v2258 = vadd.f32 %v1957, %v2257
    %v2259 = vpop.f32.mrb[0].mxu0
    %v2260 = vadd.f32 %v1961, %v2259
    %v2261 = vpop.f32.mrb[0].mxu0
    %v2262 = vpop.f32.mrb[0].mxu0
    %2263 = vdwg.mxu0
    %2264 = vmatprep.subr.bf16.mxu0 %v2081
    %2265 = vmatpush1.bf16.msra.mxu0 %v2080
    %2266 = vmatprep.subr.bf16.mxu0 %v2089
    %2267 = vmatpush1.bf16.msra.mxu0 %v2088
    %2268 = vmatprep.subr.bf16.mxu0 %v2097
    %2269 = vmatpush1.bf16.msra.mxu0 %v2096
    %2270 = vmatprep.subr.bf16.mxu0 %v2105
    %2271 = vmatpush1.bf16.msra.mxu0 %v2104
    %2272 = vmatprep.subr.bf16.mxu0 0
    %2273 = vmatpush1.bf16.msra.mxu0 0
    %2274 = vmatprep.subr.bf16.mxu0 0
    %2275 = vmatpush1.bf16.msra.mxu0 0
    %2276 = vmatprep.subr.bf16.mxu0 0
    %2277 = vmatpush1.bf16.msra.mxu0 0
    %2278 = vmatprep.subr.bf16.mxu0 0
    %2279 = vmatpush1.bf16.msra.mxu0 0
    %2280 = vmatprep.subr.bf16.mxu0 0
    %2281 = vmatpush1.bf16.msra.mxu0 0
    %2282 = vmatprep.subr.bf16.mxu0 0
    %2283 = vmatpush1.bf16.msra.mxu0 0
    %2284 = vmatprep.subr.bf16.mxu0 0
    %2285 = vmatpush1.bf16.msra.mxu0 0
    %2286 = vmatprep.subr.bf16.mxu0 0
    %2287 = vmatpush1.bf16.msra.mxu0 0
    %2288 = vmatprep.subr.bf16.mxu0 0
    %2289 = vmatpush1.bf16.msra.mxu0 0
    %2290 = vmatprep.subr.bf16.mxu0 0
    %2291 = vmatpush1.bf16.msra.mxu0 0
    %2292 = vmatprep.subr.bf16.mxu0 0
    %2293 = vmatpush1.bf16.msra.mxu0 0
    %2294 = vmatprep.subr.bf16.mxu0 0
    %2295 = vmatpush1.bf16.msra.mxu0 0
    %2296 = vmatprep.mubr.bf16.mxu0 0
    %2297 = vmatmul.mubr.bf16.gmra.mrb[0].mxu0 %v2139
    %v2298 = vpop.f32.mrb[0].mxu0
    %v2299 = vadd.f32 %v1965, %v2298
    %v2300 = vpop.f32.mrb[0].mxu0
    %v2301 = vadd.f32 %v1969, %v2300
    %v2302 = vpop.f32.mrb[0].mxu0
    %v2303 = vpop.f32.mrb[0].mxu0
    %2304 = vdwg.mxu0
    %2305 = vst [vmem:[#allocation7] sm:$0xff] %v2176
    %2306 = vst [vmem:[#allocation7 + $0x8] sm:$0xff] %v2178
    %2307 = vst [vmem:[#allocation7 + $0x10] sm:$0xff] %v2217
    %2308 = vst [vmem:[#allocation7 + $0x18] sm:$0xff] %v2219
    %2309 = vst [vmem:[#allocation7 + $0x20] sm:$0xff] %v2258
    %2310 = vst [vmem:[#allocation7 + $0x28] sm:$0xff] %v2260
    %2311 = vst [vmem:[#allocation7 + $0x30] sm:$0xff] %v2299
    %2312 = vst [vmem:[#allocation7 + $0x38] sm:$0xff] %v2301
    // Predicated region
    $region58: #{tpu_custom_call.1} parent=1 // pred_check
      _
    $region59: #{tpu_custom_call.1} parent=1 // pred_check_branch
      %2314 = sbr.rel (0) target = $region61
    $region60: #{tpu_custom_call.1} parent=1 // pred_region
      _
    $region61: #{tpu_custom_call.1} parent=1 // pred_fallthru
      _
    // Predicated region
    $region62: #{tpu_custom_call.1} parent=1 // pred_check
      _
    $region63: #{tpu_custom_call.1} parent=1 // pred_check_branch
      %2316 = sbr.rel (0) target = $region65
    $region64: #{tpu_custom_call.1} parent=1 // pred_region
      %s2318 = ssub.s32 1024, 1024
      %2319 = vsyncadd [#allocation4], %s2318
      %s2321 = sshll.u32 [#allocation7], 4
      %s2322 = int_to_ptr.vmem [resolvable:$true] %s2321
      %2324 = dma.vmem_to_hbm [thread:$0]  %s2322, 1024, %s13, [#allocation4]
    $region65: #{tpu_custom_call.1} parent=1 // pred_fallthru
      _
    // Predicated region
    $region66: #{tpu_custom_call.1} parent=1 // pred_check
      _
    $region67: #{tpu_custom_call.1} parent=1 // pred_check_branch
      %2326 = sbr.rel (0) target = $region69
    $region68: #{tpu_custom_call.1} parent=1 // pred_region
      _
    $region69: #{tpu_custom_call.1} parent=1 // pred_fallthru
      _
    // Predicated region
    $region70: #{tpu_custom_call.1} parent=1 // pred_check
      _
    $region71: #{tpu_custom_call.1} parent=1 // pred_check_branch
      %2328 = sbr.rel (0) target = $region73
    $region72: #{tpu_custom_call.1} parent=1 // pred_region
      %2329 = dma.done [#allocation4], 1024
    $region73: #{tpu_custom_call.1} parent=1 // pred_fallthru
      _
    %2330 = vsyncpa [#allocation3], 1
    %2331 = vsyncpa [#allocation6], 1
    %2332 = vsyncpa [#allocation4], 1

</llo_original>
